<compile_context>
chip_gen: v7x
topology: tpu7x:2x2x1
jax: 0.10.0
libtpu: 0.0.40
codegen_flags: <defaults>
</compile_context>

<pallas_src>
import jax
import jax.numpy as jnp
from jax.experimental import pallas as pl
from jax.experimental.pallas import tpu as pltpu

# ----------------------------- model sizes ---------------------------------
B = 2          # batch
S = 8          # encoder sequence length
E = 32         # embed_size
H = 32         # hidden_size
V = 16         # output_size (vocab)
L = 2          # num_layers
T = 4          # decode steps fused into one pallas_call
F32 = jnp.float32
G = 4 * H      # gate width = slab lane width = 128

assert E <= G and V <= G and 2 * H <= G


def _align8(n):
    return (n + 7) // 8 * 8


# ---- single weight slab (last dim = 4H = 128 lanes), 8-aligned row layout ----
OFF_WE = 0                         # layer0 emb-input weights, padded to G rows
OFF_WC = OFF_WE + G                # layer0 context-input weights (H rows)
_r = OFF_WC + H
OFF_WI = [None] * L
OFF_WH = [None] * L
OFF_B = [None] * L
OFF_WH[0] = _r; _r += H            # layer0 W_hh.T
OFF_B[0] = _r; _r = _align8(_r + 1)
for _l in range(1, L):
    OFF_WI[_l] = _r; _r += H       # layer l W_ih.T
    OFF_WH[_l] = _r; _r += H       # layer l W_hh.T
    OFF_B[_l] = _r; _r = _align8(_r + 1)
OFF_EMB = _r; _r = _align8(_r + V)  # embedding table rows (cols :E used)
OFF_AWH = _r; _r += H               # attn_W[:, :H].T   (cols :H used)
OFF_AWE = _r; _r += H               # attn_W[:, H:].T   (cols :H used)
OFF_AB = _r; _r = _align8(_r + 1)   # attn bias row     (cols :H used)
OFF_AV = _r; _r = _align8(_r + 1)   # attn v row        (cols :H used)
OFF_WFCX = _r; _r += H              # fc_W[:, :H].T     (cols :V used)
OFF_WFCC = _r; _r += H              # fc_W[:, H:].T     (cols :V used)
OFF_BFC = _r; _r = _align8(_r + 1)  # fc bias row       (cols :V used)
ROWS = _align8(_r)


# ------------------------------ Pallas kernel ------------------------------
def decoder_kernel(ids_ref, h0_ref, c0_ref, enc_ref, slab_ref,
                   logits_ref, h_ref, c_ref, emb_scr):
    t = pl.program_id(0)

    # ---- step 0: load initial recurrent state into resident output buffers ----
    @pl.when(t == 0)
    def _():
        h_ref[...] = h0_ref[...]
        c_ref[...] = c0_ref[...]

    # ---- embedding gather: clamped SMEM ids -> dynamic sublane reads ----
    for b in range(B):
        idx = jnp.clip(ids_ref[t, b], 0, V - 1)
        emb_scr[pl.ds(b, 1), :] = slab_ref[pl.ds(OFF_EMB + idx, 1), :]
    emb = emb_scr[...]                                          # (B,G); lanes E: are 0

    # ---- attention over encoder positions (all lane-dense, 128-wide) ----
    h_top = h_ref[L - 1]                                        # (B,H)  (old state)
    awh = slab_ref[OFF_AWH:OFF_AWH + H, :]                      # (H,G)
    awe = slab_ref[OFF_AWE:OFF_AWE + H, :]                      # (H,G)
    ab = slab_ref[OFF_AB:OFF_AB + 1, :]                         # (1,G)
    av = slab_ref[OFF_AV:OFF_AV + 1, :]                         # (1,G)

    enc = enc_ref[...]                                          # (B,S,H)
    e_h = jnp.dot(h_top, awh, preferred_element_type=F32)       # (B,G)
    enc_proj = jnp.dot(enc.reshape(B * S, H), awe,
                       preferred_element_type=F32).reshape(B, S, G)
    energy = jnp.tanh(enc_proj + e_h[:, None, :] + ab)          # (B,S,G); pad lanes = 0
    score = jnp.sum(energy * av, axis=-1)                       # (B,S); pad lanes * 0
    m = jnp.max(score, axis=-1, keepdims=True)
    p = jnp.exp(score - m)
    attw = p / jnp.sum(p, axis=-1, keepdims=True)               # (B,S)
    context = jnp.sum(attw[:, :, None] * enc, axis=1)           # (B,H)

    # ---- LSTM layers: concat-free fused gate matmuls ----
    x = None
    for l in range(L):
        h_prev = h_ref[l]                                       # (B,H) old state
        c_prev = c_ref[l]
        if l == 0:
            gates = (jnp.dot(emb, slab_ref[OFF_WE:OFF_WE + G, :],
                             preferred_element_type=F32)
                     + jnp.dot(context, slab_ref[OFF_WC:OFF_WC + H, :],
                               preferred_element_type=F32)
                     + jnp.dot(h_prev, slab_ref[OFF_WH[0]:OFF_WH[0] + H, :],
                               preferred_element_type=F32)
                     + slab_ref[OFF_B[0]:OFF_B[0] + 1, :])      # (B,G)
        else:
            gates = (jnp.dot(x, slab_ref[OFF_WI[l]:OFF_WI[l] + H, :],
                             preferred_element_type=F32)
                     + jnp.dot(h_prev, slab_ref[OFF_WH[l]:OFF_WH[l] + H, :],
                               preferred_element_type=F32)
                     + slab_ref[OFF_B[l]:OFF_B[l] + 1, :])      # (B,G)
        i = jax.nn.sigmoid(gates[:, 0:H])
        f = jax.nn.sigmoid(gates[:, H:2 * H])
        g = jnp.tanh(gates[:, 2 * H:3 * H])
        o = jax.nn.sigmoid(gates[:, 3 * H:4 * H])
        c_new = f * c_prev + i * g
        h_new = o * jnp.tanh(c_new)
        h_ref[l] = h_new                                        # carried to next step
        c_ref[l] = c_new
        x = h_new                              # inter-layer dropout = identity (eval)

    # ---- output projection (concat-free), lane-dense (B,128) writeback ----
    logits = (jnp.dot(x, slab_ref[OFF_WFCX:OFF_WFCX + H, :],
                      preferred_element_type=F32)
              + jnp.dot(context, slab_ref[OFF_WFCC:OFF_WFCC + H, :],
                        preferred_element_type=F32)
              + slab_ref[OFF_BFC:OFF_BFC + 1, :])               # (B,G), cols V: are 0
    logits_ref[0] = logits


# --------------------- one-time parameter packing (hoisted) -----------------
def prepare_params(params):
    """Pack all decoder weights into one contiguous (ROWS, 128) f32 slab."""
    slab = jnp.zeros((ROWS, G), F32)
    w_ih0_t = params["W_ih"][0].T                               # (E+H, 4H)
    slab = slab.at[OFF_WE:OFF_WE + E].set(w_ih0_t[:E])          # emb-input weights
    slab = slab.at[OFF_WC:OFF_WC + H].set(w_ih0_t[E:E + H])     # context-input weights
    slab = slab.at[OFF_WH[0]:OFF_WH[0] + H].set(params["W_hh"][0].T)
    slab = slab.at[OFF_B[0]].set(params["b_ih"][0] + params["b_hh"][0])
    for l in range(1, L):
        slab = slab.at[OFF_WI[l]:OFF_WI[l] + H].set(params["W_ih"][l].T)
        slab = slab.at[OFF_WH[l]:OFF_WH[l] + H].set(params["W_hh"][l].T)
        slab = slab.at[OFF_B[l]].set(params["b_ih"][l] + params["b_hh"][l])
    slab = slab.at[OFF_EMB:OFF_EMB + V, :E].set(params["emb_w"])
    slab = slab.at[OFF_AWH:OFF_AWH + H, :H].set(params["attn_W"][:, :H].T)
    slab = slab.at[OFF_AWE:OFF_AWE + H, :H].set(params["attn_W"][:, H:].T)
    slab = slab.at[OFF_AB, :H].set(params["attn_b"])
    slab = slab.at[OFF_AV, :H].set(params["attn_v"])
    slab = slab.at[OFF_WFCX:OFF_WFCX + H, :V].set(params["fc_W"][:, :H].T)
    slab = slab.at[OFF_WFCC:OFF_WFCC + H, :V].set(params["fc_W"][:, H:].T)
    slab = slab.at[OFF_BFC, :V].set(params["fc_b"])
    return slab


# ------------------------- fused multi-step wrapper --------------------------
@jax.jit
def decoder_pallas(ids_seq, hidden, cell, enc, slab):
    """Run T teacher-forced decoder steps in ONE pallas_call.

    ids_seq : (T, B) int32 token ids, one per step.
    Returns (logits (T,B,V), hidden (L,B,H), cell (L,B,H)).
    """
    t_steps = ids_seq.shape[0]
    grid_spec = pltpu.PrefetchScalarGridSpec(
        num_scalar_prefetch=1,
        grid=(t_steps,),
        in_specs=[
            pl.BlockSpec((L, B, H), lambda t, ids: (0, 0, 0)),   # hidden_0
            pl.BlockSpec((L, B, H), lambda t, ids: (0, 0, 0)),   # cell_0
            pl.BlockSpec((B, S, H), lambda t, ids: (0, 0, 0)),   # encoder_output
            pl.BlockSpec((ROWS, G), lambda t, ids: (0, 0)),      # weight slab
        ],
        out_specs=[
            pl.BlockSpec((1, B, G), lambda t, ids: (t, 0, 0)),   # per-step logits (padded)
            pl.BlockSpec((L, B, H), lambda t, ids: (0, 0, 0)),   # final hidden (resident)
            pl.BlockSpec((L, B, H), lambda t, ids: (0, 0, 0)),   # final cell   (resident)
        ],
        scratch_shapes=[pltpu.VMEM((B, G), F32)],                # embedding gather scratch
    )
    logits_pad, h_out, c_out = pl.pallas_call(
        decoder_kernel,
        out_shape=(jax.ShapeDtypeStruct((t_steps, B, G), F32),
                   jax.ShapeDtypeStruct((L, B, H), F32),
                   jax.ShapeDtypeStruct((L, B, H), F32)),
        grid_spec=grid_spec,
        compiler_params=pltpu.CompilerParams(
            dimension_semantics=("arbitrary",)),
    )(ids_seq.astype(jnp.int32), hidden, cell, enc, slab)
    return logits_pad[:, :, :V], h_out, c_out


# --------------------------- pure-JAX reference -----------------------------
def decoder_ref(ids, hidden, cell, enc, params):
    emb = params["emb_w"][ids]                                       # (B,E)
    h_top = hidden[-1]                                               # (B,H)
    hr = jnp.broadcast_to(h_top[:, None, :], (B, S, H))
    cat = jnp.concatenate([hr, enc], axis=2)                         # (B,S,2H)
    energy = jnp.tanh(cat @ params["attn_W"].T + params["attn_b"])   # (B,S,H)
    score = energy @ params["attn_v"]                                # (B,S)
    a = jax.nn.softmax(score, axis=1)
    context = jnp.einsum("bs,bsh->bh", a, enc)                       # (B,H)

    x = jnp.concatenate([emb, context], axis=1)                      # (B,E+H)
    new_h, new_c = [], []
    for l in range(L):
        gates = (x @ params["W_ih"][l].T + hidden[l] @ params["W_hh"][l].T
                 + params["b_ih"][l] + params["b_hh"][l])
        i, f, g, o = jnp.split(gates, 4, axis=1)
        i, f, o = jax.nn.sigmoid(i), jax.nn.sigmoid(f), jax.nn.sigmoid(o)
        g = jnp.tanh(g)
        c_new = f * cell[l] + i * g
        h_new = o * jnp.tanh(c_new)
        new_h.append(h_new)
        new_c.append(c_new)
        x = h_new
    logits = (jnp.concatenate([x, context], axis=1) @ params["fc_W"].T
              + params["fc_b"])
    return logits, jnp.stack(new_h), jnp.stack(new_c)


def decoder_ref_steps(ids_seq, hidden, cell, enc, params):
    h, c = hidden, cell
    outs = []
    for t in range(ids_seq.shape[0]):
        logits, h, c = decoder_ref(ids_seq[t], h, c, enc, params)
        outs.append(logits)
    return jnp.stack(outs), h, c


# --------------------------------- main --------------------------------------
if __name__ == "__main__":
    key = jax.random.PRNGKey(0)
    ks = jax.random.split(key, 24)
    sc = 0.1

    params = {
        "emb_w": jax.random.normal(ks[0], (V, E), F32) * sc,
        "attn_W": jax.random.normal(ks[1], (H, 2 * H), F32) * sc,
        "attn_b": jax.random.normal(ks[2], (H,), F32) * sc,
        "attn_v": jax.random.normal(ks[3], (H,), F32) * sc,
        "W_ih": [jax.random.normal(ks[4], (4 * H, E + H), F32) * sc,
                 jax.random.normal(ks[5], (4 * H, H), F32) * sc],
        "W_hh": [jax.random.normal(ks[6], (4 * H, H), F32) * sc,
                 jax.random.normal(ks[7], (4 * H, H), F32) * sc],
        "b_ih": [jax.random.normal(ks[8], (4 * H,), F32) * sc,
                 jax.random.normal(ks[9], (4 * H,), F32) * sc],
        "b_hh": [jax.random.normal(ks[10], (4 * H,), F32) * sc,
                 jax.random.normal(ks[11], (4 * H,), F32) * sc],
        "fc_W": jax.random.normal(ks[12], (V, 2 * H), F32) * sc,
        "fc_b": jax.random.normal(ks[13], (V,), F32) * sc,
    }

    ids_seq = jax.random.randint(ks[14], (T, B), 0, V, dtype=jnp.int32)
    hidden = jax.random.normal(ks[15], (L, B, H), F32) * sc
    cell = jax.random.normal(ks[16], (L, B, H), F32) * sc
    enc = jax.random.normal(ks[17], (B, S, H), F32) * sc

    # one-time weight packing (outside the per-call jitted function)
    slab = jax.block_until_ready(prepare_params(params))

    logits, h_out, c_out = jax.block_until_ready(
        decoder_pallas(ids_seq, hidden, cell, enc, slab))

    ref_logits, ref_h, ref_c = decoder_ref_steps(ids_seq, hidden, cell, enc, params)

    assert jnp.allclose(logits, ref_logits, atol=2e-3, rtol=2e-3), "logits mismatch"
    assert jnp.allclose(h_out, ref_h, atol=2e-3, rtol=2e-3), "hidden mismatch"
    assert jnp.allclose(c_out, ref_c, atol=2e-3, rtol=2e-3), "cell mismatch"

    print("KERNEL_OK")
</pallas_src>

<mosaic_0001>
module attributes {stable_mosaic.version = 11 : i64} {
  func.func @decoder_kernel(%arg0: i32, %arg1: memref<4x2xi32, #tpu.memory_space<smem>>, %arg2: memref<2x2x32xf32, #tpu.memory_space<vmem>>, %arg3: memref<2x2x32xf32, #tpu.memory_space<vmem>>, %arg4: memref<2x8x32xf32, #tpu.memory_space<vmem>>, %arg5: memref<440x128xf32, #tpu.memory_space<vmem>>, %arg6: memref<1x2x128xf32, #tpu.memory_space<vmem>>, %arg7: memref<2x2x32xf32, #tpu.memory_space<vmem>>, %arg8: memref<2x2x32xf32, #tpu.memory_space<vmem>>, %arg9: memref<2x128xf32, #tpu.memory_space<vmem>>) attributes {dimension_semantics = [#tpu.dimension_semantics<arbitrary>], iteration_bounds = array<i64: 4>, scalar_prefetch = 1 : i64, scratch_operands = 1 : i64, tpu.core_type = #tpu.core_type<tc>, window_params = [{pipeline_mode = #tpu.pipeline_mode<synchronous>, transform_indices = @transform_0, window_bounds = array<i64: 2, 2, 32>}, {pipeline_mode = #tpu.pipeline_mode<synchronous>, transform_indices = @transform_1, window_bounds = array<i64: 2, 2, 32>}, {pipeline_mode = #tpu.pipeline_mode<synchronous>, transform_indices = @transform_2, window_bounds = array<i64: 2, 8, 32>}, {pipeline_mode = #tpu.pipeline_mode<synchronous>, transform_indices = @transform_3, window_bounds = array<i64: 440, 128>}, {transform_indices = @transform_4, window_bounds = array<i64: 1, 2, 128>}, {pipeline_mode = #tpu.pipeline_mode<synchronous>, transform_indices = @transform_5, window_bounds = array<i64: 2, 2, 32>}, {pipeline_mode = #tpu.pipeline_mode<synchronous>, transform_indices = @transform_6, window_bounds = array<i64: 2, 2, 32>}]} {
    %c0_i32 = arith.constant 0 : i32
    %0 = arith.cmpi eq, %arg0, %c0_i32 : i32
    %1 = arith.extui %0 : i1 to i32
    %c0_i32_0 = arith.constant 0 : i32
    %2 = arith.cmpi ne, %1, %c0_i32_0 : i32
    scf.if %2 {
      %c0_79 = arith.constant 0 : index
      %c0_80 = arith.constant 0 : index
      %c0_81 = arith.constant 0 : index
      %155 = vector.load %arg2[%c0_79, %c0_80, %c0_81] : memref<2x2x32xf32, #tpu.memory_space<vmem>>, vector<2x2x32xf32>
      %c0_82 = arith.constant 0 : index
      %c0_83 = arith.constant 0 : index
      %c0_84 = arith.constant 0 : index
      %156 = vector.load %arg7[%c0_82, %c0_83, %c0_84] : memref<2x2x32xf32, #tpu.memory_space<vmem>>, vector<2x2x32xf32>
      tpu.vector_store %arg7[%c0_82, %c0_83, %c0_84], %155 {strides = array<i32>} : memref<2x2x32xf32, #tpu.memory_space<vmem>>, vector<2x2x32xf32>,
      %c0_85 = arith.constant 0 : index
      %c0_86 = arith.constant 0 : index
      %c0_87 = arith.constant 0 : index
      %157 = vector.load %arg3[%c0_85, %c0_86, %c0_87] : memref<2x2x32xf32, #tpu.memory_space<vmem>>, vector<2x2x32xf32>
      %c0_88 = arith.constant 0 : index
      %c0_89 = arith.constant 0 : index
      %c0_90 = arith.constant 0 : index
      %158 = vector.load %arg8[%c0_88, %c0_89, %c0_90] : memref<2x2x32xf32, #tpu.memory_space<vmem>>, vector<2x2x32xf32>
      tpu.vector_store %arg8[%c0_88, %c0_89, %c0_90], %157 {strides = array<i32>} : memref<2x2x32xf32, #tpu.memory_space<vmem>>, vector<2x2x32xf32>,
    } else {
    }
    %3 = arith.index_cast %arg0 : i32 to index
    %c0 = arith.constant 0 : index
    %4 = memref.load %arg1[%3, %c0] : memref<4x2xi32, #tpu.memory_space<smem>>
    %c0_i32_1 = arith.constant 0 : i32
    %c15_i32 = arith.constant 15 : i32
    %5 = arith.maxsi %c0_i32_1, %4 : i32
    %6 = arith.minsi %c15_i32, %5 : i32
    %c272_i32 = arith.constant 272 : i32
    %7 = arith.addi %c272_i32, %6 : i32
    %8 = arith.index_cast %7 : i32 to index
    %c0_2 = arith.constant 0 : index
    %9 = vector.load %arg5[%8, %c0_2] : memref<440x128xf32, #tpu.memory_space<vmem>>, vector<1x128xf32>
    %c0_3 = arith.constant 0 : index
    %c0_4 = arith.constant 0 : index
    %10 = vector.load %arg9[%c0_3, %c0_4] : memref<2x128xf32, #tpu.memory_space<vmem>>, vector<1x128xf32>
    tpu.vector_store %arg9[%c0_3, %c0_4], %9 {strides = array<i32>} : memref<2x128xf32, #tpu.memory_space<vmem>>, vector<1x128xf32>,
    %11 = arith.index_cast %arg0 : i32 to index
    %c1 = arith.constant 1 : index
    %12 = memref.load %arg1[%11, %c1] : memref<4x2xi32, #tpu.memory_space<smem>>
    %c0_i32_5 = arith.constant 0 : i32
    %c15_i32_6 = arith.constant 15 : i32
    %13 = arith.maxsi %c0_i32_5, %12 : i32
    %14 = arith.minsi %c15_i32_6, %13 : i32
    %c272_i32_7 = arith.constant 272 : i32
    %15 = arith.addi %c272_i32_7, %14 : i32
    %16 = arith.index_cast %15 : i32 to index
    %c0_8 = arith.constant 0 : index
    %17 = vector.load %arg5[%16, %c0_8] : memref<440x128xf32, #tpu.memory_space<vmem>>, vector<1x128xf32>
    %c1_9 = arith.constant 1 : index
    %c0_10 = arith.constant 0 : index
    %18 = vector.load %arg9[%c1_9, %c0_10] : memref<2x128xf32, #tpu.memory_space<vmem>>, vector<1x128xf32>
    tpu.vector_store %arg9[%c1_9, %c0_10], %17 {strides = array<i32>} : memref<2x128xf32, #tpu.memory_space<vmem>>, vector<1x128xf32>,
    %c0_11 = arith.constant 0 : index
    %c0_12 = arith.constant 0 : index
    %19 = vector.load %arg9[%c0_11, %c0_12] : memref<2x128xf32, #tpu.memory_space<vmem>>, vector<2x128xf32>
    %c1_13 = arith.constant 1 : index
    %c0_14 = arith.constant 0 : index
    %c0_15 = arith.constant 0 : index
    %20 = vector.load %arg7[%c1_13, %c0_14, %c0_15] : memref<2x2x32xf32, #tpu.memory_space<vmem>>, vector<1x2x32xf32>
    %21 = vector.shape_cast %20 : vector<1x2x32xf32> to vector<2x32xf32>
    %c288 = arith.constant 288 : index
    %c0_16 = arith.constant 0 : index
    %22 = vector.load %arg5[%c288, %c0_16] : memref<440x128xf32, #tpu.memory_space<vmem>>, vector<32x128xf32>
    %c320 = arith.constant 320 : index
    %c0_17 = arith.constant 0 : index
    %23 = vector.load %arg5[%c320, %c0_17] : memref<440x128xf32, #tpu.memory_space<vmem>>, vector<32x128xf32>
    %c352 = arith.constant 352 : index
    %c0_18 = arith.constant 0 : index
    %24 = vector.load %arg5[%c352, %c0_18] : memref<440x128xf32, #tpu.memory_space<vmem>>, vector<1x128xf32>
    %c360 = arith.constant 360 : index
    %c0_19 = arith.constant 0 : index
    %25 = vector.load %arg5[%c360, %c0_19] : memref<440x128xf32, #tpu.memory_space<vmem>>, vector<1x128xf32>
    %c0_20 = arith.constant 0 : index
    %c0_21 = arith.constant 0 : index
    %c0_22 = arith.constant 0 : index
    %26 = vector.load %arg4[%c0_20, %c0_21, %c0_22] : memref<2x8x32xf32, #tpu.memory_space<vmem>>, vector<2x8x32xf32>
    %cst = arith.constant dense<0.000000e+00> : vector<2x128xf32>
    %27 = tpu.matmul %21, %22, %cst {dimension_numbers = #tpu.dot_dimension_numbers<[1], [0], [0], [1], [0, 0, 1, 1], [], []>} : vector<2x32xf32>, vector<32x128xf32>, vector<2x128xf32> -> vector<2x128xf32>
    %28 = vector.shape_cast %26 : vector<2x8x32xf32> to vector<16x32xf32>
    %cst_23 = arith.constant dense<0.000000e+00> : vector<16x128xf32>
    %29 = tpu.matmul %28, %23, %cst_23 {dimension_numbers = #tpu.dot_dimension_numbers<[1], [0], [0], [1], [0, 0, 1, 1], [], []>} : vector<16x32xf32>, vector<32x128xf32>, vector<16x128xf32> -> vector<16x128xf32>
    %30 = vector.shape_cast %29 : vector<16x128xf32> to vector<2x8x128xf32>
    %31 = vector.shape_cast %27 : vector<2x128xf32> to vector<2x1x128xf32>
    %32 = vector.broadcast %31 : vector<2x1x128xf32> to vector<2x8x128xf32>
    %33 = arith.addf %30, %32 : vector<2x8x128xf32>
    %34 = vector.shape_cast %24 : vector<1x128xf32> to vector<1x1x128xf32>
    %35 = vector.broadcast %34 : vector<1x1x128xf32> to vector<2x8x128xf32>
    %36 = arith.addf %33, %35 : vector<2x8x128xf32>
    %37 = math.tanh %36 : vector<2x8x128xf32>
    %38 = vector.shape_cast %25 : vector<1x128xf32> to vector<1x1x128xf32>
    %39 = vector.broadcast %38 : vector<1x1x128xf32> to vector<2x8x128xf32>
    %40 = arith.mulf %37, %39 : vector<2x8x128xf32>
    %cst_24 = arith.constant dense<0.000000e+00> : vector<2x8xf32>
    %41 = vector.multi_reduction <add>, %40, %cst_24 [2] : vector<2x8x128xf32> to vector<2x8xf32>
    %cst_25 = arith.constant dense<0xFF800000> : vector<2xf32>
    %42 = vector.multi_reduction <maximumf>, %41, %cst_25 [1] : vector<2x8xf32> to vector<2xf32>
    %43 = vector.shape_cast %42 : vector<2xf32> to vector<2x1xf32>
    %44 = vector.broadcast %43 : vector<2x1xf32> to vector<2x8xf32>
    %45 = arith.subf %41, %44 : vector<2x8xf32>
    %46 = math.exp %45 : vector<2x8xf32>
    %cst_26 = arith.constant dense<0.000000e+00> : vector<2xf32>
    %47 = vector.multi_reduction <add>, %46, %cst_26 [1] : vector<2x8xf32> to vector<2xf32>
    %48 = vector.shape_cast %47 : vector<2xf32> to vector<2x1xf32>
    %49 = vector.broadcast %48 : vector<2x1xf32> to vector<2x8xf32>
    %50 = arith.divf %46, %49 : vector<2x8xf32>
    %51 = vector.shape_cast %50 : vector<2x8xf32> to vector<2x8x1xf32>
    %52 = vector.broadcast %51 : vector<2x8x1xf32> to vector<2x8x32xf32>
    %53 = arith.mulf %52, %26 : vector<2x8x32xf32>
    %cst_27 = arith.constant dense<0.000000e+00> : vector<2x32xf32>
    %54 = vector.multi_reduction <add>, %53, %cst_27 [1] : vector<2x8x32xf32> to vector<2x32xf32>
    %c0_28 = arith.constant 0 : index
    %c0_29 = arith.constant 0 : index
    %c0_30 = arith.constant 0 : index
    %55 = vector.load %arg7[%c0_28, %c0_29, %c0_30] : memref<2x2x32xf32, #tpu.memory_space<vmem>>, vector<1x2x32xf32>
    %56 = vector.shape_cast %55 : vector<1x2x32xf32> to vector<2x32xf32>
    %c0_31 = arith.constant 0 : index
    %c0_32 = arith.constant 0 : index
    %c0_33 = arith.constant 0 : index
    %57 = vector.load %arg8[%c0_31, %c0_32, %c0_33] : memref<2x2x32xf32, #tpu.memory_space<vmem>>, vector<1x2x32xf32>
    %58 = vector.shape_cast %57 : vector<1x2x32xf32> to vector<2x32xf32>
    %c0_34 = arith.constant 0 : index
    %c0_35 = arith.constant 0 : index
    %59 = vector.load %arg5[%c0_34, %c0_35] : memref<440x128xf32, #tpu.memory_space<vmem>>, vector<128x128xf32>
    %cst_36 = arith.constant dense<0.000000e+00> : vector<2x128xf32>
    %60 = tpu.matmul %19, %59, %cst_36 {dimension_numbers = #tpu.dot_dimension_numbers<[1], [0], [0], [1], [0, 0, 1, 1], [], []>} : vector<2x128xf32>, vector<128x128xf32>, vector<2x128xf32> -> vector<2x128xf32>
    %c128 = arith.constant 128 : index
    %c0_37 = arith.constant 0 : index
    %61 = vector.load %arg5[%c128, %c0_37] : memref<440x128xf32, #tpu.memory_space<vmem>>, vector<32x128xf32>
    %cst_38 = arith.constant dense<0.000000e+00> : vector<2x128xf32>
    %62 = tpu.matmul %54, %61, %cst_38 {dimension_numbers = #tpu.dot_dimension_numbers<[1], [0], [0], [1], [0, 0, 1, 1], [], []>} : vector<2x32xf32>, vector<32x128xf32>, vector<2x128xf32> -> vector<2x128xf32>
    %63 = arith.addf %60, %62 : vector<2x128xf32>
    %c160 = arith.constant 160 : index
    %c0_39 = arith.constant 0 : index
    %64 = vector.load %arg5[%c160, %c0_39] : memref<440x128xf32, #tpu.memory_space<vmem>>, vector<32x128xf32>
    %cst_40 = arith.constant dense<0.000000e+00> : vector<2x128xf32>
    %65 = tpu.matmul %56, %64, %cst_40 {dimension_numbers = #tpu.dot_dimension_numbers<[1], [0], [0], [1], [0, 0, 1, 1], [], []>} : vector<2x32xf32>, vector<32x128xf32>, vector<2x128xf32> -> vector<2x128xf32>
    %66 = arith.addf %63, %65 : vector<2x128xf32>
    %c192 = arith.constant 192 : index
    %c0_41 = arith.constant 0 : index
    %67 = vector.load %arg5[%c192, %c0_41] : memref<440x128xf32, #tpu.memory_space<vmem>>, vector<1x128xf32>
    %68 = vector.broadcast %67 : vector<1x128xf32> to vector<2x128xf32>
    %69 = arith.addf %66, %68 : vector<2x128xf32>
    %70 = vector.extract_strided_slice %69 {offsets = [0, 0], sizes = [2, 32], strides = [1, 1]} : vector<2x128xf32> to vector<2x32xf32>
    %71 = arith.negf %70 : vector<2x32xf32>
    %72 = math.exp %71 : vector<2x32xf32>
    %cst_42 = arith.constant 1.000000e+00 : f32
    %73 = vector.broadcast %cst_42 : f32 to vector<2x32xf32>
    %74 = arith.addf %73, %72 : vector<2x32xf32>
    %75 = arith.divf %73, %74 : vector<2x32xf32>
    %76 = vector.extract_strided_slice %69 {offsets = [0, 32], sizes = [2, 32], strides = [1, 1]} : vector<2x128xf32> to vector<2x32xf32>
    %77 = arith.negf %76 : vector<2x32xf32>
    %78 = math.exp %77 : vector<2x32xf32>
    %cst_43 = arith.constant 1.000000e+00 : f32
    %79 = vector.broadcast %cst_43 : f32 to vector<2x32xf32>
    %80 = arith.addf %79, %78 : vector<2x32xf32>
    %81 = arith.divf %79, %80 : vector<2x32xf32>
    %82 = vector.extract_strided_slice %69 {offsets = [0, 64], sizes = [2, 32], strides = [1, 1]} : vector<2x128xf32> to vector<2x32xf32>
    %83 = math.tanh %82 : vector<2x32xf32>
    %84 = vector.extract_strided_slice %69 {offsets = [0, 96], sizes = [2, 32], strides = [1, 1]} : vector<2x128xf32> to vector<2x32xf32>
    %85 = arith.negf %84 : vector<2x32xf32>
    %86 = math.exp %85 : vector<2x32xf32>
    %cst_44 = arith.constant 1.000000e+00 : f32
    %87 = vector.broadcast %cst_44 : f32 to vector<2x32xf32>
    %88 = arith.addf %87, %86 : vector<2x32xf32>
    %89 = arith.divf %87, %88 : vector<2x32xf32>
    %90 = arith.mulf %81, %58 : vector<2x32xf32>
    %91 = arith.mulf %75, %83 : vector<2x32xf32>
    %92 = arith.addf %90, %91 : vector<2x32xf32>
    %93 = math.tanh %92 : vector<2x32xf32>
    %94 = arith.mulf %89, %93 : vector<2x32xf32>
    %c0_45 = arith.constant 0 : index
    %c0_46 = arith.constant 0 : index
    %c0_47 = arith.constant 0 : index
    %95 = vector.load %arg7[%c0_45, %c0_46, %c0_47] : memref<2x2x32xf32, #tpu.memory_space<vmem>>, vector<1x2x32xf32>
    %96 = vector.shape_cast %95 : vector<1x2x32xf32> to vector<2x32xf32>
    %97 = vector.shape_cast %94 : vector<2x32xf32> to vector<1x2x32xf32>
    tpu.vector_store %arg7[%c0_45, %c0_46, %c0_47], %97 {strides = array<i32>} : memref<2x2x32xf32, #tpu.memory_space<vmem>>, vector<1x2x32xf32>,
    %c0_48 = arith.constant 0 : index
    %c0_49 = arith.constant 0 : index
    %c0_50 = arith.constant 0 : index
    %98 = vector.load %arg8[%c0_48, %c0_49, %c0_50] : memref<2x2x32xf32, #tpu.memory_space<vmem>>, vector<1x2x32xf32>
    %99 = vector.shape_cast %98 : vector<1x2x32xf32> to vector<2x32xf32>
    %100 = vector.shape_cast %92 : vector<2x32xf32> to vector<1x2x32xf32>
    tpu.vector_store %arg8[%c0_48, %c0_49, %c0_50], %100 {strides = array<i32>} : memref<2x2x32xf32, #tpu.memory_space<vmem>>, vector<1x2x32xf32>,
    %c1_51 = arith.constant 1 : index
    %c0_52 = arith.constant 0 : index
    %c0_53 = arith.constant 0 : index
    %101 = vector.load %arg7[%c1_51, %c0_52, %c0_53] : memref<2x2x32xf32, #tpu.memory_space<vmem>>, vector<1x2x32xf32>
    %102 = vector.shape_cast %101 : vector<1x2x32xf32> to vector<2x32xf32>
    %c1_54 = arith.constant 1 : index
    %c0_55 = arith.constant 0 : index
    %c0_56 = arith.constant 0 : index
    %103 = vector.load %arg8[%c1_54, %c0_55, %c0_56] : memref<2x2x32xf32, #tpu.memory_space<vmem>>, vector<1x2x32xf32>
    %104 = vector.shape_cast %103 : vector<1x2x32xf32> to vector<2x32xf32>
    %c200 = arith.constant 200 : index
    %c0_57 = arith.constant 0 : index
    %105 = vector.load %arg5[%c200, %c0_57] : memref<440x128xf32, #tpu.memory_space<vmem>>, vector<32x128xf32>
    %cst_58 = arith.constant dense<0.000000e+00> : vector<2x128xf32>
    %106 = tpu.matmul %94, %105, %cst_58 {dimension_numbers = #tpu.dot_dimension_numbers<[1], [0], [0], [1], [0, 0, 1, 1], [], []>} : vector<2x32xf32>, vector<32x128xf32>, vector<2x128xf32> -> vector<2x128xf32>
    %c232 = arith.constant 232 : index
    %c0_59 = arith.constant 0 : index
    %107 = vector.load %arg5[%c232, %c0_59] : memref<440x128xf32, #tpu.memory_space<vmem>>, vector<32x128xf32>
    %cst_60 = arith.constant dense<0.000000e+00> : vector<2x128xf32>
    %108 = tpu.matmul %102, %107, %cst_60 {dimension_numbers = #tpu.dot_dimension_numbers<[1], [0], [0], [1], [0, 0, 1, 1], [], []>} : vector<2x32xf32>, vector<32x128xf32>, vector<2x128xf32> -> vector<2x128xf32>
    %109 = arith.addf %106, %108 : vector<2x128xf32>
    %c264 = arith.constant 264 : index
    %c0_61 = arith.constant 0 : index
    %110 = vector.load %arg5[%c264, %c0_61] : memref<440x128xf32, #tpu.memory_space<vmem>>, vector<1x128xf32>
    %111 = vector.broadcast %110 : vector<1x128xf32> to vector<2x128xf32>
    %112 = arith.addf %109, %111 : vector<2x128xf32>
    %113 = vector.extract_strided_slice %112 {offsets = [0, 0], sizes = [2, 32], strides = [1, 1]} : vector<2x128xf32> to vector<2x32xf32>
    %114 = arith.negf %113 : vector<2x32xf32>
    %115 = math.exp %114 : vector<2x32xf32>
    %cst_62 = arith.constant 1.000000e+00 : f32
    %116 = vector.broadcast %cst_62 : f32 to vector<2x32xf32>
    %117 = arith.addf %116, %115 : vector<2x32xf32>
    %118 = arith.divf %116, %117 : vector<2x32xf32>
    %119 = vector.extract_strided_slice %112 {offsets = [0, 32], sizes = [2, 32], strides = [1, 1]} : vector<2x128xf32> to vector<2x32xf32>
    %120 = arith.negf %119 : vector<2x32xf32>
    %121 = math.exp %120 : vector<2x32xf32>
    %cst_63 = arith.constant 1.000000e+00 : f32
    %122 = vector.broadcast %cst_63 : f32 to vector<2x32xf32>
    %123 = arith.addf %122, %121 : vector<2x32xf32>
    %124 = arith.divf %122, %123 : vector<2x32xf32>
    %125 = vector.extract_strided_slice %112 {offsets = [0, 64], sizes = [2, 32], strides = [1, 1]} : vector<2x128xf32> to vector<2x32xf32>
    %126 = math.tanh %125 : vector<2x32xf32>
    %127 = vector.extract_strided_slice %112 {offsets = [0, 96], sizes = [2, 32], strides = [1, 1]} : vector<2x128xf32> to vector<2x32xf32>
    %128 = arith.negf %127 : vector<2x32xf32>
    %129 = math.exp %128 : vector<2x32xf32>
    %cst_64 = arith.constant 1.000000e+00 : f32
    %130 = vector.broadcast %cst_64 : f32 to vector<2x32xf32>
    %131 = arith.addf %130, %129 : vector<2x32xf32>
    %132 = arith.divf %130, %131 : vector<2x32xf32>
    %133 = arith.mulf %124, %104 : vector<2x32xf32>
    %134 = arith.mulf %118, %126 : vector<2x32xf32>
    %135 = arith.addf %133, %134 : vector<2x32xf32>
    %136 = math.tanh %135 : vector<2x32xf32>
    %137 = arith.mulf %132, %136 : vector<2x32xf32>
    %c1_65 = arith.constant 1 : index
    %c0_66 = arith.constant 0 : index
    %c0_67 = arith.constant 0 : index
    %138 = vector.load %arg7[%c1_65, %c0_66, %c0_67] : memref<2x2x32xf32, #tpu.memory_space<vmem>>, vector<1x2x32xf32>
    %139 = vector.shape_cast %138 : vector<1x2x32xf32> to vector<2x32xf32>
    %140 = vector.shape_cast %137 : vector<2x32xf32> to vector<1x2x32xf32>
    tpu.vector_store %arg7[%c1_65, %c0_66, %c0_67], %140 {strides = array<i32>} : memref<2x2x32xf32, #tpu.memory_space<vmem>>, vector<1x2x32xf32>,
    %c1_68 = arith.constant 1 : index
    %c0_69 = arith.constant 0 : index
    %c0_70 = arith.constant 0 : index
    %141 = vector.load %arg8[%c1_68, %c0_69, %c0_70] : memref<2x2x32xf32, #tpu.memory_space<vmem>>, vector<1x2x32xf32>
    %142 = vector.shape_cast %141 : vector<1x2x32xf32> to vector<2x32xf32>
    %143 = vector.shape_cast %135 : vector<2x32xf32> to vector<1x2x32xf32>
    tpu.vector_store %arg8[%c1_68, %c0_69, %c0_70], %143 {strides = array<i32>} : memref<2x2x32xf32, #tpu.memory_space<vmem>>, vector<1x2x32xf32>,
    %c368 = arith.constant 368 : index
    %c0_71 = arith.constant 0 : index
    %144 = vector.load %arg5[%c368, %c0_71] : memref<440x128xf32, #tpu.memory_space<vmem>>, vector<32x128xf32>
    %cst_72 = arith.constant dense<0.000000e+00> : vector<2x128xf32>
    %145 = tpu.matmul %137, %144, %cst_72 {dimension_numbers = #tpu.dot_dimension_numbers<[1], [0], [0], [1], [0, 0, 1, 1], [], []>} : vector<2x32xf32>, vector<32x128xf32>, vector<2x128xf32> -> vector<2x128xf32>
    %c400 = arith.constant 400 : index
    %c0_73 = arith.constant 0 : index
    %146 = vector.load %arg5[%c400, %c0_73] : memref<440x128xf32, #tpu.memory_space<vmem>>, vector<32x128xf32>
    %cst_74 = arith.constant dense<0.000000e+00> : vector<2x128xf32>
    %147 = tpu.matmul %54, %146, %cst_74 {dimension_numbers = #tpu.dot_dimension_numbers<[1], [0], [0], [1], [0, 0, 1, 1], [], []>} : vector<2x32xf32>, vector<32x128xf32>, vector<2x128xf32> -> vector<2x128xf32>
    %148 = arith.addf %145, %147 : vector<2x128xf32>
    %c432 = arith.constant 432 : index
    %c0_75 = arith.constant 0 : index
    %149 = vector.load %arg5[%c432, %c0_75] : memref<440x128xf32, #tpu.memory_space<vmem>>, vector<1x128xf32>
    %150 = vector.broadcast %149 : vector<1x128xf32> to vector<2x128xf32>
    %151 = arith.addf %148, %150 : vector<2x128xf32>
    %c0_76 = arith.constant 0 : index
    %c0_77 = arith.constant 0 : index
    %c0_78 = arith.constant 0 : index
    %152 = vector.load %arg6[%c0_76, %c0_77, %c0_78] : memref<1x2x128xf32, #tpu.memory_space<vmem>>, vector<1x2x128xf32>
    %153 = vector.shape_cast %152 : vector<1x2x128xf32> to vector<2x128xf32>
    %154 = vector.shape_cast %151 : vector<2x128xf32> to vector<1x2x128xf32>
    tpu.vector_store %arg6[%c0_76, %c0_77, %c0_78], %154 {strides = array<i32>} : memref<1x2x128xf32, #tpu.memory_space<vmem>>, vector<1x2x128xf32>,
    return
  }
  func.func @transform_0(%arg0: i32, %arg1: memref<4x2xi32, #tpu.memory_space<smem>>) -> (i32, i32, i32) {
    %c0_i32 = arith.constant 0 : i32
    %c0_i32_0 = arith.constant 0 : i32
    %c0_i32_1 = arith.constant 0 : i32
    %c0_i32_2 = arith.constant 0 : i32
    return %c0_i32, %c0_i32_0, %c0_i32_1 : i32, i32, i32
  }
  func.func @transform_1(%arg0: i32, %arg1: memref<4x2xi32, #tpu.memory_space<smem>>) -> (i32, i32, i32) {
    %c0_i32 = arith.constant 0 : i32
    %c0_i32_0 = arith.constant 0 : i32
    %c0_i32_1 = arith.constant 0 : i32
    %c0_i32_2 = arith.constant 0 : i32
    return %c0_i32, %c0_i32_0, %c0_i32_1 : i32, i32, i32
  }
  func.func @transform_2(%arg0: i32, %arg1: memref<4x2xi32, #tpu.memory_space<smem>>) -> (i32, i32, i32) {
    %c0_i32 = arith.constant 0 : i32
    %c0_i32_0 = arith.constant 0 : i32
    %c0_i32_1 = arith.constant 0 : i32
    %c0_i32_2 = arith.constant 0 : i32
    return %c0_i32, %c0_i32_0, %c0_i32_1 : i32, i32, i32
  }
  func.func @transform_3(%arg0: i32, %arg1: memref<4x2xi32, #tpu.memory_space<smem>>) -> (i32, i32) {
    %c0_i32 = arith.constant 0 : i32
    %c0_i32_0 = arith.constant 0 : i32
    %c0_i32_1 = arith.constant 0 : i32
    return %c0_i32, %c0_i32_0 : i32, i32
  }
  func.func @transform_4(%arg0: i32, %arg1: memref<4x2xi32, #tpu.memory_space<smem>>) -> (i32, i32, i32) {
    %c0_i32 = arith.constant 0 : i32
    %c0_i32_0 = arith.constant 0 : i32
    %c0_i32_1 = arith.constant 0 : i32
    return %arg0, %c0_i32, %c0_i32_0 : i32, i32, i32
  }
  func.func @transform_5(%arg0: i32, %arg1: memref<4x2xi32, #tpu.memory_space<smem>>) -> (i32, i32, i32) {
    %c0_i32 = arith.constant 0 : i32
    %c0_i32_0 = arith.constant 0 : i32
    %c0_i32_1 = arith.constant 0 : i32
    %c0_i32_2 = arith.constant 0 : i32
    return %c0_i32, %c0_i32_0, %c0_i32_1 : i32, i32, i32
  }
  func.func @transform_6(%arg0: i32, %arg1: memref<4x2xi32, #tpu.memory_space<smem>>) -> (i32, i32, i32) {
    %c0_i32 = arith.constant 0 : i32
    %c0_i32_0 = arith.constant 0 : i32
    %c0_i32_1 = arith.constant 0 : i32
    %c0_i32_2 = arith.constant 0 : i32
    return %c0_i32, %c0_i32_0, %c0_i32_1 : i32, i32, i32
  }
}

</mosaic_0001>

<llo_original>
// kernel: decoder_pallas.1
$region0: #{decoder_pallas.1}
  #allocation0 [shape = 'u32[]', space=smem, size = 0x4, offset = 0x4, fixed_abs, tag = 'smem constant byte address 0x4 - core index']
  #allocation1 [shape = 'u32[144,128]{1,0:T(1,128)}', space=vmem, size = 0x12000, scoped, tag = 'internal scratch']
  #allocation2 [shape = 'f32[2,128]{1,0:T(2,128)}', space=vmem, size = 0x400, scoped, tag = 'scratch operand']
  #allocation3 [shape = 's32[1]{0}', space=sflag, size = 0x4, scoped, tag = 'scoped memory for decoder_pallas.1']
  #allocation4 [shape = 'u8[2048]{0}', space=smem, size = 0x800, scoped, tag = 'prefetched SMEM operand 0']
  %s0 = inlined_call_operand.vmem [shape: s32[4,2], index: 0, kind: input, shape index: {}]
  %s1 = inlined_call_operand.hbm [shape: f32[2,2,32], index: 1, kind: input, shape index: {}]
  %s2 = inlined_call_operand.hbm [shape: f32[2,2,32], index: 2, kind: input, shape index: {}]
  %s3 = inlined_call_operand.vmem [shape: f32[2,8,32], index: 3, kind: input, shape index: {}]
  %s4 = inlined_call_operand.hbm [shape: f32[440,128], index: 4, kind: input, shape index: {}]
  %s5 = inlined_call_operand.hbm [shape: f32[4,2,128], index: 5, kind: output, shape index: {0}]
  %s6 = inlined_call_operand.hbm [shape: f32[2,2,32], index: 6, kind: output, shape index: {1}]
  %s7 = inlined_call_operand.hbm [shape: f32[2,2,32], index: 7, kind: output, shape index: {2}]
  %8 = xla_tuple %s5, %s6, %s7
  %s9 = sld [smem:[#allocation0]]
  $region81: #{decoder_pallas.1} parent=0
    _
  %s11 = ssub.s32 1, %s9
  %s12 = scalar_select 0, %s11, %s9
  %s13 = sshll.u32 %s0, 4
  %s14 = int_to_ptr.vmem [resolvable:$true] %s13
  %16 = dma.vmem_to_smem %s14, 64, [#allocation4], [#allocation3]
  %17 = dma.done [#allocation3], 64
  %18 = sfence
  $region1: #{decoder_pallas.1} parent=0
    #allocation5 [shape = 'u8[2048]{0}', space=vmem, size = 0x800, scoped, tag = 'input window, operand 1, single buffered']
    #allocation6 [shape = 's32[2]{0}', space=sflag, size = 0x8, scoped, tag = 'scoped memory for decoder_pallas.1']
    #allocation7 [shape = 's32[2]{0}', space=sflag, size = 0x8, scoped, tag = 'scoped memory for decoder_pallas.1']
    #allocation8 [shape = 'u8[2048]{0}', space=vmem, size = 0x800, scoped, tag = 'input window, operand 2, single buffered']
    #allocation9 [shape = 's32[1]{0}', space=sflag, size = 0x4, scoped, tag = 'scoped memory for decoder_pallas.1']
    #allocation10 [shape = 'u8[225280]{0}', space=vmem, size = 0x37000, scoped, tag = 'input window, operand 4, single buffered']
    #allocation11 [shape = 'u8[2048]{0}', space=vmem, size = 0x800, scoped, tag = 'output window, operand 0']
    #allocation12 [shape = 'u8[2048]{0}', space=vmem, size = 0x800, scoped, tag = 'output window, operand 1, single buffered']
    #allocation13 [shape = 's32[1]{0}', space=sflag, size = 0x4, scoped, tag = 'scoped memory for decoder_pallas.1']
    #allocation14 [shape = 'u8[2048]{0}', space=vmem, size = 0x800, scoped, tag = 'output window, operand 2, single buffered']
    %19 = vsyncpa [#allocation6], 0
    %20 = vsyncpa [#allocation9], 0
    %21 = vsyncpa [#allocation7], 0
    %s22 = scalar_lea.sflag [#allocation7], 1
    %23 = vsyncpa %s22, 0
    %24 = vsyncpa [#allocation13], 0
    loop: start=0, step=1, limit=6
    $region2: #{decoder_pallas.1} parent=1 // loop_pre_header
      _
    $region3: #{decoder_pallas.1} parent=1 // loop_header
      %s26 = sphi 0, %s30
      %p27 = scmp.ge.s32.totalorder %s26, 6
      %s34 = sphi 0, %s34
      %s36 = sphi 0, %s34
      %s37 = sphi 0, %s36
      %s51 = sphi 0, %s37
      %s55 = sphi 0, %s55
      %s57 = sphi 0, %s55
      %s58 = sphi 0, %s57
      %s72 = sphi 0, %s58
      %s76 = sphi 0, %s76
      %s78 = sphi 0, %s76
      %s79 = sphi 0, %s78
      %s93 = sphi 0, %s79
      %s97 = sphi 0, %s97
      %s99 = sphi 0, %s97
      %s100 = sphi 0, %s99
      %s114 = sphi 0, %s100
      %s120 = sphi 0, %s122
      %s123 = sphi 0, %s120
      %s124 = sphi 0, %s123
      %s140 = sphi 0, %s124
      %s144 = sphi 0, %s144
      %s146 = sphi 0, %s144
      %s147 = sphi 0, %s146
      %s161 = sphi 0, %s147
      %s165 = sphi 0, %s165
      %s167 = sphi 0, %s165
      %s168 = sphi 0, %s167
      %s182 = sphi 0, %s168
    $region4: #{decoder_pallas.1} parent=1 // loop_header_branch
      %29 = sbr.rel (%p27) target = $region8
    $region5: #{decoder_pallas.1} parent=1 // loop_body
      %s31 = ssub.s32 %s26, 1
      %s32 = ssub.s32 %s26, 2
      %s33 = sadd.s32 %s26, 1
      %s35 = sadd.s32 %s34, 1
      %p38 = scmp.eq.s32.totalorder %s26, 3
      %p39 = scmp.ne.s32.totalorder %s34, %s36
      %p40 = scmp.eq.s32.totalorder %s26, 0
      %p41 = por %p39, %p40
      %p42 = scmp.ne.s32.totalorder %s34, %s36
      %p43 = scmp.eq.s32.totalorder %s31, 3
      %p44 = por %p42, %p43
      %p45 = scmp.ne.s32.totalorder %s36, %s37
      %p46 = scmp.eq.s32.totalorder %s31, 0
      %p47 = por %p45, %p46
      %p48 = scmp.ne.s32.totalorder %s36, %s37
      %p49 = scmp.eq.s32.totalorder %s32, 3
      %p50 = por %p48, %p49
      %p52 = scmp.ne.s32.totalorder %s37, %s51
      %p53 = scmp.eq.s32.totalorder %s32, 0
      %p54 = por %p52, %p53
      %s56 = sadd.s32 %s55, 1
      %p59 = scmp.eq.s32.totalorder %s26, 3
      %p60 = scmp.ne.s32.totalorder %s55, %s57
      %p61 = scmp.eq.s32.totalorder %s26, 0
      %p62 = por %p60, %p61
      %p63 = scmp.ne.s32.totalorder %s55, %s57
      %p64 = scmp.eq.s32.totalorder %s31, 3
      %p65 = por %p63, %p64
      %p66 = scmp.ne.s32.totalorder %s57, %s58
      %p67 = scmp.eq.s32.totalorder %s31, 0
      %p68 = por %p66, %p67
      %p69 = scmp.ne.s32.totalorder %s57, %s58
      %p70 = scmp.eq.s32.totalorder %s32, 3
      %p71 = por %p69, %p70
      %p73 = scmp.ne.s32.totalorder %s58, %s72
      %p74 = scmp.eq.s32.totalorder %s32, 0
      %p75 = por %p73, %p74
      %s77 = sadd.s32 %s76, 1
      %p80 = scmp.eq.s32.totalorder %s26, 3
      %p81 = scmp.ne.s32.totalorder %s76, %s78
      %p82 = scmp.eq.s32.totalorder %s26, 0
      %p83 = por %p81, %p82
      %p84 = scmp.ne.s32.totalorder %s76, %s78
      %p85 = scmp.eq.s32.totalorder %s31, 3
      %p86 = por %p84, %p85
      %p87 = scmp.ne.s32.totalorder %s78, %s79
      %p88 = scmp.eq.s32.totalorder %s31, 0
      %p89 = por %p87, %p88
      %p90 = scmp.ne.s32.totalorder %s78, %s79
      %p91 = scmp.eq.s32.totalorder %s32, 3
      %p92 = por %p90, %p91
      %p94 = scmp.ne.s32.totalorder %s79, %s93
      %p95 = scmp.eq.s32.totalorder %s32, 0
      %p96 = por %p94, %p95
      %s98 = sadd.s32 %s97, 1
      %p101 = scmp.eq.s32.totalorder %s26, 3
      %p102 = scmp.ne.s32.totalorder %s97, %s99
      %p103 = scmp.eq.s32.totalorder %s26, 0
      %p104 = por %p102, %p103
      %p105 = scmp.ne.s32.totalorder %s97, %s99
      %p106 = scmp.eq.s32.totalorder %s31, 3
      %p107 = por %p105, %p106
      %p108 = scmp.ne.s32.totalorder %s99, %s100
      %p109 = scmp.eq.s32.totalorder %s31, 0
      %p110 = por %p108, %p109
      %p111 = scmp.ne.s32.totalorder %s99, %s100
      %p112 = scmp.eq.s32.totalorder %s32, 3
      %p113 = por %p111, %p112
      %p115 = scmp.ne.s32.totalorder %s100, %s114
      %p116 = scmp.eq.s32.totalorder %s32, 0
      %p117 = por %p115, %p116
      %s118 = ssub.s32 %s26, %s33
      %p119 = scmp.eq.s32.totalorder %s118, 0
      %s121 = sadd.s32 %s120, 1
      %s122 = scalar_select %p119, %s120, %s121
      %p125 = pneg %p119
      %p126 = scmp.eq.s32.totalorder %s26, 3
      %p127 = por %p125, %p126
      %p128 = scmp.ne.s32.totalorder %s120, %s123
      %p129 = scmp.eq.s32.totalorder %s26, 0
      %p130 = por %p128, %p129
      %p131 = scmp.ne.s32.totalorder %s120, %s123
      %p132 = scmp.eq.s32.totalorder %s31, 3
      %p133 = por %p131, %p132
      %p134 = scmp.ne.s32.totalorder %s123, %s124
      %p135 = scmp.eq.s32.totalorder %s31, 0
      %p136 = por %p134, %p135
      %p137 = scmp.ne.s32.totalorder %s123, %s124
      %p138 = scmp.eq.s32.totalorder %s32, 3
      %p139 = por %p137, %p138
      %p141 = scmp.ne.s32.totalorder %s124, %s140
      %p142 = scmp.eq.s32.totalorder %s32, 0
      %p143 = por %p141, %p142
      %s145 = sadd.s32 %s144, 1
      %p148 = scmp.eq.s32.totalorder %s26, 3
      %p149 = scmp.ne.s32.totalorder %s144, %s146
      %p150 = scmp.eq.s32.totalorder %s26, 0
      %p151 = por %p149, %p150
      %p152 = scmp.ne.s32.totalorder %s144, %s146
      %p153 = scmp.eq.s32.totalorder %s31, 3
      %p154 = por %p152, %p153
      %p155 = scmp.ne.s32.totalorder %s146, %s147
      %p156 = scmp.eq.s32.totalorder %s31, 0
      %p157 = por %p155, %p156
      %p158 = scmp.ne.s32.totalorder %s146, %s147
      %p159 = scmp.eq.s32.totalorder %s32, 3
      %p160 = por %p158, %p159
      %p162 = scmp.ne.s32.totalorder %s147, %s161
      %p163 = scmp.eq.s32.totalorder %s32, 0
      %p164 = por %p162, %p163
      %s166 = sadd.s32 %s165, 1
      %p169 = scmp.eq.s32.totalorder %s26, 3
      %p170 = scmp.ne.s32.totalorder %s165, %s167
      %p171 = scmp.eq.s32.totalorder %s26, 0
      %p172 = por %p170, %p171
      %p173 = scmp.ne.s32.totalorder %s165, %s167
      %p174 = scmp.eq.s32.totalorder %s31, 3
      %p175 = por %p173, %p174
      %p176 = scmp.ne.s32.totalorder %s167, %s168
      %p177 = scmp.eq.s32.totalorder %s31, 0
      %p178 = por %p176, %p177
      %p179 = scmp.ne.s32.totalorder %s167, %s168
      %p180 = scmp.eq.s32.totalorder %s32, 3
      %p181 = por %p179, %p180
      %p183 = scmp.ne.s32.totalorder %s168, %s182
      %p184 = scmp.eq.s32.totalorder %s32, 0
      %p185 = por %p183, %p184
      %p186 = scmp.le.s32.totalorder 1, %s26
      %p187 = scmp.lt.s32.totalorder %s26, 5
      %p188 = pnand %p186, %p187
      %p189 = pneg %p188
      // Predicated region
      $region9: #{decoder_pallas.1} parent=5 // pred_check
        _
      $region10: #{decoder_pallas.1} parent=5 // pred_check_branch
        %191 = sbr.rel (%p188) target = $region12
      $region11: #{decoder_pallas.1} parent=5 // pred_region
        %s192 = ssub.s32 %s26, 1
        // Predicated region
        $region13: #{decoder_pallas.1} parent=11 // pred_check
          %p193 = pneg %p47
        $region14: #{decoder_pallas.1} parent=11 // pred_check_branch
          %195 = sbr.rel (%p193) target = $region16
        $region15: #{decoder_pallas.1} parent=11 // pred_region
          %s197 = ssub.s32 64, 64
          %198 = vsyncadd [#allocation6], %s197
          %s199 = sshll.u32 [#allocation5], 4
          %s200 = int_to_ptr.vmem [resolvable:$true] %s199
          %205 = dma.hbm_to_vmem [thread:$0]  %s1, 64, %s200, [#allocation6], 32, 32, 2
        $region16: #{decoder_pallas.1} parent=11 // pred_fallthru
          _
        // Predicated region
        $region17: #{decoder_pallas.1} parent=11 // pred_check
          %p206 = pneg %p68
        $region18: #{decoder_pallas.1} parent=11 // pred_check_branch
          %208 = sbr.rel (%p206) target = $region20
        $region19: #{decoder_pallas.1} parent=11 // pred_region
          %s210 = ssub.s32 64, 64
          %211 = vsyncadd [#allocation9], %s210
          %s212 = sshll.u32 [#allocation8], 4
          %s213 = int_to_ptr.vmem [resolvable:$true] %s212
          %218 = dma.hbm_to_vmem [thread:$0]  %s2, 64, %s213, [#allocation9], 32, 32, 2
        $region20: #{decoder_pallas.1} parent=11 // pred_fallthru
          _
        // Predicated region
        $region21: #{decoder_pallas.1} parent=11 // pred_check
          %p219 = pneg %p89
        $region22: #{decoder_pallas.1} parent=11 // pred_check_branch
          %221 = sbr.rel (%p219) target = $region24
        $region23: #{decoder_pallas.1} parent=11 // pred_region
          _
        $region24: #{decoder_pallas.1} parent=11 // pred_fallthru
          _
        // Predicated region
        $region25: #{decoder_pallas.1} parent=11 // pred_check
          %p222 = pneg %p110
        $region26: #{decoder_pallas.1} parent=11 // pred_check_branch
          %224 = sbr.rel (%p222) target = $region28
        $region27: #{decoder_pallas.1} parent=11 // pred_region
          %s226 = ssub.s32 7040, 7040
          %227 = vsyncadd [#allocation9], %s226
          %s228 = sshll.u32 [#allocation10], 4
          %s229 = int_to_ptr.vmem [resolvable:$true] %s228
          %234 = dma.hbm_to_vmem [thread:$0]  %s4, 7040, %s229, [#allocation9], 128, 128, 8
        $region28: #{decoder_pallas.1} parent=11 // pred_fallthru
          _
      $region12: #{decoder_pallas.1} parent=5 // pred_fallthru
        _
      %p235 = scmp.lt.s32.totalorder %s26, 4
      // Predicated region
      $region29: #{decoder_pallas.1} parent=5 // pred_check
        %p236 = pneg %p235
      $region30: #{decoder_pallas.1} parent=5 // pred_check_branch
        %238 = sbr.rel (%p236) target = $region32
      $region31: #{decoder_pallas.1} parent=5 // pred_region
        _
      $region32: #{decoder_pallas.1} parent=5 // pred_fallthru
        _
      %p239 = scmp.le.s32.totalorder 1, %s26
      %p240 = scmp.lt.s32.totalorder %s26, 5
      %p241 = pnand %p239, %p240
      %p242 = pneg %p241
      // Predicated region
      $region33: #{decoder_pallas.1} parent=5 // pred_check
        _
      $region34: #{decoder_pallas.1} parent=5 // pred_check_branch
        %244 = sbr.rel (%p241) target = $region36
      $region35: #{decoder_pallas.1} parent=5 // pred_region
        %s245 = ssub.s32 %s26, 1
        // Predicated region
        $region37: #{decoder_pallas.1} parent=35 // pred_check
          %p246 = pneg %p47
        $region38: #{decoder_pallas.1} parent=35 // pred_check_branch
          %248 = sbr.rel (%p246) target = $region40
        $region39: #{decoder_pallas.1} parent=35 // pred_region
          %249 = dma.done [#allocation6], 64
        $region40: #{decoder_pallas.1} parent=35 // pred_fallthru
          _
        // Predicated region
        $region41: #{decoder_pallas.1} parent=35 // pred_check
          %p250 = pneg %p68
        $region42: #{decoder_pallas.1} parent=35 // pred_check_branch
          %252 = sbr.rel (%p250) target = $region44
        $region43: #{decoder_pallas.1} parent=35 // pred_region
          %253 = dma.done [#allocation9], 64
        $region44: #{decoder_pallas.1} parent=35 // pred_fallthru
          _
        // Predicated region
        $region45: #{decoder_pallas.1} parent=35 // pred_check
          %p254 = pneg %p110
        $region46: #{decoder_pallas.1} parent=35 // pred_check_branch
          %256 = sbr.rel (%p254) target = $region48
        $region47: #{decoder_pallas.1} parent=35 // pred_region
          %257 = dma.done [#allocation9], 7040
        $region48: #{decoder_pallas.1} parent=35 // pred_fallthru
          _
        %p258 = pneg %p47
        %p259 = pneg %p44
        %p260 = pneg %p68
        %p261 = pneg %p65
        %p262 = pneg %p89
        %p263 = pneg %p86
        %p264 = pneg %p110
        %p265 = pneg %p107
        %p266 = pneg %p136
        %p267 = pneg %p133
        %s268 = sand.u32 %s123, 1
        %s269 = scalar_lea.sflag [#allocation7], %s268
        %s270 = sand.u32 %s123, 1
        %s271 = smul.addr %s270, 2
        %s272 = scalar_lea.vmem [#allocation11], %s271
        %p273 = pneg %p157
        %p274 = pneg %p154
        %p275 = pneg %p178
        %p276 = pneg %p175
        %p277 = scmp.eq.s32.totalorder %s31, 0
        // Predicated region
        $region49: #{decoder_pallas.1} parent=35 // pred_check
          %p278 = pneg %p277
        $region50: #{decoder_pallas.1} parent=35 // pred_check_branch
          %280 = sbr.rel (%p278) target = $region52
        $region51: #{decoder_pallas.1} parent=35 // pred_region
          %v281 = vld [vmem:[#allocation5] sm:$0x3]
          %v282 = vld [vmem:[#allocation5 + $0x2] sm:$0x3]
          %vm283 = vcmask 254976
          %284 = vst.msk [vmem:[#allocation12] sm:$0x3] %vm283, %v281
          %285 = vst.msk [vmem:[#allocation12 + $0x2] sm:$0x3] %vm283, %v282
          %v286 = vld [vmem:[#allocation8] sm:$0x3]
          %v287 = vld [vmem:[#allocation8 + $0x2] sm:$0x3]
          %288 = vst.msk [vmem:[#allocation14] sm:$0x3] %vm283, %v286
          %289 = vst.msk [vmem:[#allocation14 + $0x2] sm:$0x3] %vm283, %v287
        $region52: #{decoder_pallas.1} parent=35 // pred_fallthru
          _
        %s290 = smul.u32 %s31, 128
        %s291 = sld [smem:[#allocation4 + %s290]]
        %p292 = scmp.gt.s32.totalorder %s291, 0
        %s293 = scalar_select %p292, %s291, 0
        %p294 = scmp.lt.s32.totalorder %s293, 15
        %s295 = scalar_select %p294, %s293, 15
        %s296 = sadd.s32 %s295, 272
        %s297 = scalar_lea.vmem [#allocation10], %s296
        %v298 = vld [vmem:[%s297] sm:$0x1]
        %299 = vst [vmem:[#allocation2] sm:$0x1] %v298
        %s300 = sadd.s32 %s290, 1
        %s301 = sld [smem:[#allocation4 + %s300]]
        %p302 = scmp.gt.s32.totalorder %s301, 0
        %s303 = scalar_select %p302, %s301, 0
        %p304 = scmp.lt.s32.totalorder %s303, 15
        %s305 = scalar_select %p304, %s303, 15
        %s306 = sadd.s32 %s305, 272
        %s307 = scalar_lea.vmem [#allocation10], %s306
        %v308 = vld [vmem:[%s307] sm:$0x1]
        %309 = vst [vmem:[#allocation2 + $0x1] sm:$0x1] %v308
        %v310 = vld [vmem:[#allocation2] sm:$0x3]
        %s311 = scalar_lea.vmem [#allocation12], 2
        %v312 = vld [vmem:[%s311] sm:$0x3]
        %v313 = vld [vmem:[#allocation10 + $0x120] sm:$0xff]
        %v314 = vld [vmem:[#allocation10 + $0x128] sm:$0xff]
        %v315 = vld [vmem:[#allocation10 + $0x130] sm:$0xff]
        %v316 = vld [vmem:[#allocation10 + $0x138] sm:$0xff]
        %v317 = vld [vmem:[#allocation10 + $0x140] sm:$0xff]
        %v318 = vld [vmem:[#allocation10 + $0x148] sm:$0xff]
        %v319 = vld [vmem:[#allocation10 + $0x150] sm:$0xff]
        %v320 = vld [vmem:[#allocation10 + $0x158] sm:$0xff]
        %v321 = vld [vmem:[#allocation10 + $0x160] sm:$0x1]
        %v322 = vld [vmem:[#allocation10 + $0x168] sm:$0x1]
        %v323 = vld [vmem:[%s3] sm:$0xff]
        %v324 = vld [vmem:[%s3 + $0x8] sm:$0xff]
        %vm325 = vcmask 261120
        %v327 = vsel %vm325, %v312, 0
        %329 = vmatprep.subr.mxu0 0.0
        %330 = vmatpush1.msra.mxu0 %v313
        %331 = vmatprep.subr.mxu0 0.0
        %332 = vmatpush1.msra.mxu0 %v314
        %333 = vmatprep.subr.mxu0 0.0
        %334 = vmatpush1.msra.mxu0 %v315
        %335 = vmatprep.subr.mxu0 0.0
        %336 = vmatpush1.msra.mxu0 %v316
        %337 = vmatprep.subr.mxu0 0.0
        %338 = vmatpush1.msra.mxu0 0.0
        %339 = vmatprep.subr.mxu0 0.0
        %340 = vmatpush1.msra.mxu0 0.0
        %341 = vmatprep.subr.mxu0 0.0
        %342 = vmatpush1.msra.mxu0 0.0
        %343 = vmatprep.subr.mxu0 0.0
        %344 = vmatpush1.msra.mxu0 0.0
        %345 = vmatprep.subr.mxu0 0.0
        %346 = vmatpush1.msra.mxu0 0.0
        %347 = vmatprep.subr.mxu0 0.0
        %348 = vmatpush1.msra.mxu0 0.0
        %349 = vmatprep.subr.mxu0 0.0
        %350 = vmatpush1.msra.mxu0 0.0
        %351 = vmatprep.subr.mxu0 0.0
        %352 = vmatpush1.msra.mxu0 0.0
        %353 = vmatprep.subr.mxu0 0.0
        %354 = vmatpush1.msra.mxu0 0.0
        %355 = vmatprep.subr.mxu0 0.0
        %356 = vmatpush1.msra.mxu0 0.0
        %357 = vmatprep.subr.mxu0 0.0
        %358 = vmatpush1.msra.mxu0 0.0
        %359 = vmatprep.subr.mxu0 0.0
        %360 = vmatpush1.msra.mxu0 0.0
        %361 = vmatprep.subr.mxu0 0.0
        %362 = vmatpush1.msra.mxu0 0.0
        %363 = vmatprep.subr.mxu0 0.0
        %364 = vmatpush1.msra.mxu0 0.0
        %365 = vmatprep.subr.mxu0 0.0
        %366 = vmatpush1.msra.mxu0 0.0
        %367 = vmatprep.subr.mxu0 0.0
        %368 = vmatpush1.msra.mxu0 0.0
        %369 = vmatprep.subr.mxu0 0.0
        %370 = vmatpush1.msra.mxu0 0.0
        %371 = vmatprep.subr.mxu0 0.0
        %372 = vmatpush1.msra.mxu0 0.0
        %373 = vmatprep.subr.mxu0 0.0
        %374 = vmatpush1.msra.mxu0 0.0
        %375 = vmatprep.subr.mxu0 0.0
        %376 = vmatpush1.msra.mxu0 0.0
        %377 = vmatprep.subr.mxu0 0.0
        %378 = vmatpush1.msra.mxu0 0.0
        %379 = vmatprep.subr.mxu0 0.0
        %380 = vmatpush1.msra.mxu0 0.0
        %381 = vmatprep.subr.mxu0 0.0
        %382 = vmatpush1.msra.mxu0 0.0
        %383 = vmatprep.subr.mxu0 0.0
        %384 = vmatpush1.msra.mxu0 0.0
        %385 = vmatprep.subr.mxu0 0.0
        %386 = vmatpush1.msra.mxu0 0.0
        %387 = vmatprep.subr.mxu0 0.0
        %388 = vmatpush1.msra.mxu0 0.0
        %389 = vmatprep.subr.mxu0 0.0
        %390 = vmatpush1.msra.mxu0 0.0
        %391 = vmatprep.subr.mxu0 0.0
        %392 = vmatpush1.msra.mxu0 0.0
        %393 = vmatprep.mubr.f32.mxu0 0.0
        %394 = vmatmul.mubr.f32.gmra.mrb[0].mxu0 %v327
        %v395 = vpop.f32.mrb[0].mxu0
        %v396 = vadd.f32 0.0, %v395
        %v397 = vpop.f32.mrb[0].mxu0
        %398 = vdwg.mxu0
        %v400 = vsel %vm325, %v323, 0
        %v403 = vsel %vm325, %v324, 0
        %405 = vmatprep.subr.mxu0 0.0
        %406 = vmatpush1.msra.mxu0 %v317
        %407 = vmatprep.subr.mxu0 0.0
        %408 = vmatpush1.msra.mxu0 %v318
        %409 = vmatprep.subr.mxu0 0.0
        %410 = vmatpush1.msra.mxu0 %v319
        %411 = vmatprep.subr.mxu0 0.0
        %412 = vmatpush1.msra.mxu0 %v320
        %413 = vmatprep.subr.mxu0 0.0
        %414 = vmatpush1.msra.mxu0 0.0
        %415 = vmatprep.subr.mxu0 0.0
        %416 = vmatpush1.msra.mxu0 0.0
        %417 = vmatprep.subr.mxu0 0.0
        %418 = vmatpush1.msra.mxu0 0.0
        %419 = vmatprep.subr.mxu0 0.0
        %420 = vmatpush1.msra.mxu0 0.0
        %421 = vmatprep.subr.mxu0 0.0
        %422 = vmatpush1.msra.mxu0 0.0
        %423 = vmatprep.subr.mxu0 0.0
        %424 = vmatpush1.msra.mxu0 0.0
        %425 = vmatprep.subr.mxu0 0.0
        %426 = vmatpush1.msra.mxu0 0.0
        %427 = vmatprep.subr.mxu0 0.0
        %428 = vmatpush1.msra.mxu0 0.0
        %429 = vmatprep.subr.mxu0 0.0
        %430 = vmatpush1.msra.mxu0 0.0
        %431 = vmatprep.subr.mxu0 0.0
        %432 = vmatpush1.msra.mxu0 0.0
        %433 = vmatprep.subr.mxu0 0.0
        %434 = vmatpush1.msra.mxu0 0.0
        %435 = vmatprep.subr.mxu0 0.0
        %436 = vmatpush1.msra.mxu0 0.0
        %437 = vmatprep.subr.mxu0 0.0
        %438 = vmatpush1.msra.mxu0 0.0
        %439 = vmatprep.subr.mxu0 0.0
        %440 = vmatpush1.msra.mxu0 0.0
        %441 = vmatprep.subr.mxu0 0.0
        %442 = vmatpush1.msra.mxu0 0.0
        %443 = vmatprep.subr.mxu0 0.0
        %444 = vmatpush1.msra.mxu0 0.0
        %445 = vmatprep.subr.mxu0 0.0
        %446 = vmatpush1.msra.mxu0 0.0
        %447 = vmatprep.subr.mxu0 0.0
        %448 = vmatpush1.msra.mxu0 0.0
        %449 = vmatprep.subr.mxu0 0.0
        %450 = vmatpush1.msra.mxu0 0.0
        %451 = vmatprep.subr.mxu0 0.0
        %452 = vmatpush1.msra.mxu0 0.0
        %453 = vmatprep.subr.mxu0 0.0
        %454 = vmatpush1.msra.mxu0 0.0
        %455 = vmatprep.subr.mxu0 0.0
        %456 = vmatpush1.msra.mxu0 0.0
        %457 = vmatprep.subr.mxu0 0.0
        %458 = vmatpush1.msra.mxu0 0.0
        %459 = vmatprep.subr.mxu0 0.0
        %460 = vmatpush1.msra.mxu0 0.0
        %461 = vmatprep.subr.mxu0 0.0
        %462 = vmatpush1.msra.mxu0 0.0
        %463 = vmatprep.subr.mxu0 0.0
        %464 = vmatpush1.msra.mxu0 0.0
        %465 = vmatprep.subr.mxu0 0.0
        %466 = vmatpush1.msra.mxu0 0.0
        %467 = vmatprep.subr.mxu0 0.0
        %468 = vmatpush1.msra.mxu0 0.0
        %469 = vmatprep.mubr.f32.mxu0 0.0
        %470 = vmatmul.mubr.f32.gmra.mrb[0].mxu0 %v400
        %v471 = vpop.f32.mrb[0].mxu0
        %v472 = vadd.f32 0.0, %v471
        %v473 = vpop.f32.mrb[0].mxu0
        %474 = vmatprep.mubr.f32.mxu0 0.0
        %475 = vmatmul.mubr.f32.gmra.mrb[0].mxu0 %v403
        %v476 = vpop.f32.mrb[0].mxu0
        %v477 = vadd.f32 0.0, %v476
        %v478 = vpop.f32.mrb[0].mxu0
        %479 = vdwg.mxu0
        %v482 = vunpack.c.l.s4 1966171168
        %v483 = vunpack.c.0.s8 %v482
        %v484 = vlaneseq
        %v485 = vshrl.u32 %v484, 7
        %v486 = vsub.s32 %v483, %v485
        %v487 = vrot.slane %v396, %v486
        %v488 = vcombine.high %v487, %v487
        %v490 = vunpack.c.l.s4 1966171168
        %v491 = vunpack.c.0.s8 %v490
        %v492 = vlaneseq
        %v493 = vshrl.u32 %v492, 7
        %v494 = vsub.s32 %v491, %v493
        %v495 = vrot.slane %v487, %v494
        %v497 = vunpack.c.l.s4 1966171168
        %v498 = vunpack.c.0.s8 %v497
        %v499 = vlaneseq
        %v500 = vshrl.u32 %v499, 7
        %v501 = vsub.s32 %v498, %v500
        %v502 = vrot.slane %v488, %v501
        %v503 = vlaneseq
        %v504 = vshrl.u32 %v503, 7
        %v505 = vsub.s32 0, %v504
        %v506 = vrot.slane %v495, %v505
        %v507 = vlaneseq
        %v508 = vshrl.u32 %v507, 7
        %v509 = vsub.s32 0, %v508
        %v510 = vrot.slane %v502, %v509
        %v513 = vadd.f32 %v472, %v506
        %v514 = vadd.f32 %v477, %v510
        %v515 = vlaneseq
        %v516 = vshrl.u32 %v515, 7
        %v517 = vsub.s32 0, %v516
        %v518 = vrot.slane %v321, %v517
        %v519 = vadd.f32 %v513, %v518
        %v520 = vadd.f32 %v514, %v518
        %v521 = vtanh.pop %v519
        %v522 = vtanh.pop %v520
        %v523 = vlaneseq
        %v524 = vshrl.u32 %v523, 7
        %v525 = vsub.s32 0, %v524
        %v526 = vrot.slane %v322, %v525
        %v527 = vmul.f32 %v521, %v526
        %v528 = vmul.f32 %v522, %v526
        %529 = vadd.xlane.f32.xlu0 %v527
        %v530 = vpop.xlane.xlu0 %529
        %531 = vadd.xlane.f32.xlu0 %v528
        %v532 = vpop.xlane.xlu0 %531
        %v535 = vlaneseq
        %v536 = vand.u32 %v535, 127
        %v537 = vlaneseq
        %v538 = vshrl.u32 %v537, 7
        %v539 = vsub.s32 %v536, %v538
        %v540 = vrot.slane %v530, %v539
        %v541 = vlaneseq
        %v542 = vshrl.u32 %v541, 7
        %v543 = vsub.s32 %v536, %v542
        %v544 = vrot.slane %v532, %v543
        %vm545 = vcmask 1041409
        %v546 = vsel %vm545, %v544, %v540
        %vm548 = vcmask 58368
        %v549 = vsel %vm548, %v546, -inf
        %550 = vmax.xlane.f32.xlu0 %v549
        %v551 = vpop.xlane.xlu0 %550
        %v553 = vlaneseq
        %v554 = vshrl.u32 %v553, 7
        %v555 = vsub.s32 0, %v554
        %v556 = vrot.slane %v551, %v555
        %v557 = vlaneseq
        %v558 = vshrl.u32 %v557, 7
        %v559 = vsub.s32 1, %v558
        %v560 = vrot.slane %v551, %v559
        %v563 = vsub.f32 %v530, %v556
        %v564 = vsub.f32 %v532, %v560
        %v565 = vmul.f32 %v563, 1.442695
        %v566 = vpow.pop %v565
        %v567 = vmul.f32 %v564, 1.442695
        %v568 = vpow.pop %v567
        %571 = vset.pattern.permute.xlu0 0
        %572 = vperm.xlu0 %571, %v566
        %v573 = vpop.permute.xlu0 %572
        %574 = vset.pattern.permute.xlu0 0
        %575 = vperm.xlu0 %574, %v568
        %v576 = vpop.permute.xlu0 %575
        %v577 = vlaneseq
        %v578 = vshrl.u32 %v577, 7
        %v579 = vsub.s32 %v536, %v578
        %v580 = vrot.slane %v573, %v579
        %v581 = vlaneseq
        %v582 = vshrl.u32 %v581, 7
        %v583 = vsub.s32 %v536, %v582
        %v584 = vrot.slane %v576, %v583
        %v585 = vsel %vm545, %v584, %v580
        %v587 = vsel %vm548, %v585, 0.0
        %588 = vadd.xlane.f32.xlu0 %v587
        %v589 = vpop.xlane.xlu0 %588
        %v591 = vlaneseq
        %v592 = vshrl.u32 %v591, 7
        %v593 = vsub.s32 0, %v592
        %v594 = vrot.slane %v589, %v593
        %v595 = vlaneseq
        %v596 = vshrl.u32 %v595, 7
        %v597 = vsub.s32 1, %v596
        %v598 = vrot.slane %v589, %v597
        %v601 = vrcp.pop %v594
        %v602 = vmul.f32 %v566, %v601
        %v603 = vrcp.pop %v598
        %v604 = vmul.f32 %v568, %v603
        %606 = vset.pattern.permute.xlu0 0
        %607 = vperm.xlu0 %606, %v602
        %v608 = vpop.permute.xlu0 %607
        %611 = vset.pattern.permute.xlu0 0
        %612 = vperm.xlu0 %611, %v604
        %v613 = vpop.permute.xlu0 %612
        %v615 = vmul.f32 %v608, %v323
        %v616 = vmul.f32 %v613, %v324
        %v617 = vsel %vm325, %v615, 0.0
        %v618 = vrot.slane %v617, 4
        %v619 = vadd.f32 %v617, %v618
        %v620 = vrot.slane %v619, 2
        %v621 = vadd.f32 %v619, %v620
        %v622 = vrot.slane %v621, 1
        %v623 = vadd.f32 %v621, %v622
        %v624 = vsel %vm325, %v616, 0.0
        %v625 = vrot.slane %v624, 4
        %v626 = vadd.f32 %v624, %v625
        %v627 = vrot.slane %v626, 2
        %v628 = vadd.f32 %v626, %v627
        %v629 = vrot.slane %v628, 1
        %v630 = vadd.f32 %v628, %v629
        %v631 = vld [vmem:[#allocation12] sm:$0x3]
        %v632 = vld [vmem:[#allocation14] sm:$0x3]
        %v633 = vld [vmem:[#allocation10] sm:$0xff]
        %v634 = vld [vmem:[#allocation10 + $0x8] sm:$0xff]
        %v635 = vld [vmem:[#allocation10 + $0x10] sm:$0xff]
        %v636 = vld [vmem:[#allocation10 + $0x18] sm:$0xff]
        %v637 = vld [vmem:[#allocation10 + $0x20] sm:$0xff]
        %v638 = vld [vmem:[#allocation10 + $0x28] sm:$0xff]
        %v639 = vld [vmem:[#allocation10 + $0x30] sm:$0xff]
        %v640 = vld [vmem:[#allocation10 + $0x38] sm:$0xff]
        %v641 = vld [vmem:[#allocation10 + $0x40] sm:$0xff]
        %v642 = vld [vmem:[#allocation10 + $0x48] sm:$0xff]
        %v643 = vld [vmem:[#allocation10 + $0x50] sm:$0xff]
        %v644 = vld [vmem:[#allocation10 + $0x58] sm:$0xff]
        %v645 = vld [vmem:[#allocation10 + $0x60] sm:$0xff]
        %v646 = vld [vmem:[#allocation10 + $0x68] sm:$0xff]
        %v647 = vld [vmem:[#allocation10 + $0x70] sm:$0xff]
        %v648 = vld [vmem:[#allocation10 + $0x78] sm:$0xff]
        %v649 = vld [vmem:[#allocation10 + $0x80] sm:$0xff]
        %v650 = vld [vmem:[#allocation10 + $0x88] sm:$0xff]
        %v651 = vld [vmem:[#allocation10 + $0x90] sm:$0xff]
        %v652 = vld [vmem:[#allocation10 + $0x98] sm:$0xff]
        %v655 = vsel %vm545, %v630, %v623
        %v656 = vsel %vm325, %v655, 0
        %658 = vmatprep.subr.mxu0 0.0
        %659 = vmatpush1.msra.mxu0 %v649
        %660 = vmatprep.subr.mxu0 0.0
        %661 = vmatpush1.msra.mxu0 %v650
        %662 = vmatprep.subr.mxu0 0.0
        %663 = vmatpush1.msra.mxu0 %v651
        %664 = vmatprep.subr.mxu0 0.0
        %665 = vmatpush1.msra.mxu0 %v652
        %666 = vmatprep.subr.mxu0 0.0
        %667 = vmatpush1.msra.mxu0 0.0
        %668 = vmatprep.subr.mxu0 0.0
        %669 = vmatpush1.msra.mxu0 0.0
        %670 = vmatprep.subr.mxu0 0.0
        %671 = vmatpush1.msra.mxu0 0.0
        %672 = vmatprep.subr.mxu0 0.0
        %673 = vmatpush1.msra.mxu0 0.0
        %674 = vmatprep.subr.mxu0 0.0
        %675 = vmatpush1.msra.mxu0 0.0
        %676 = vmatprep.subr.mxu0 0.0
        %677 = vmatpush1.msra.mxu0 0.0
        %678 = vmatprep.subr.mxu0 0.0
        %679 = vmatpush1.msra.mxu0 0.0
        %680 = vmatprep.subr.mxu0 0.0
        %681 = vmatpush1.msra.mxu0 0.0
        %682 = vmatprep.subr.mxu0 0.0
        %683 = vmatpush1.msra.mxu0 0.0
        %684 = vmatprep.subr.mxu0 0.0
        %685 = vmatpush1.msra.mxu0 0.0
        %686 = vmatprep.subr.mxu0 0.0
        %687 = vmatpush1.msra.mxu0 0.0
        %688 = vmatprep.subr.mxu0 0.0
        %689 = vmatpush1.msra.mxu0 0.0
        %690 = vmatprep.subr.mxu0 0.0
        %691 = vmatpush1.msra.mxu0 0.0
        %692 = vmatprep.subr.mxu0 0.0
        %693 = vmatpush1.msra.mxu0 0.0
        %694 = vmatprep.subr.mxu0 0.0
        %695 = vmatpush1.msra.mxu0 0.0
        %696 = vmatprep.subr.mxu0 0.0
        %697 = vmatpush1.msra.mxu0 0.0
        %698 = vmatprep.subr.mxu0 0.0
        %699 = vmatpush1.msra.mxu0 0.0
        %700 = vmatprep.subr.mxu0 0.0
        %701 = vmatpush1.msra.mxu0 0.0
        %702 = vmatprep.subr.mxu0 0.0
        %703 = vmatpush1.msra.mxu0 0.0
        %704 = vmatprep.subr.mxu0 0.0
        %705 = vmatpush1.msra.mxu0 0.0
        %706 = vmatprep.subr.mxu0 0.0
        %707 = vmatpush1.msra.mxu0 0.0
        %708 = vmatprep.subr.mxu0 0.0
        %709 = vmatpush1.msra.mxu0 0.0
        %710 = vmatprep.subr.mxu0 0.0
        %711 = vmatpush1.msra.mxu0 0.0
        %712 = vmatprep.subr.mxu0 0.0
        %713 = vmatpush1.msra.mxu0 0.0
        %714 = vmatprep.subr.mxu0 0.0
        %715 = vmatpush1.msra.mxu0 0.0
        %716 = vmatprep.subr.mxu0 0.0
        %717 = vmatpush1.msra.mxu0 0.0
        %718 = vmatprep.subr.mxu0 0.0
        %719 = vmatpush1.msra.mxu0 0.0
        %720 = vmatprep.subr.mxu0 0.0
        %721 = vmatpush1.msra.mxu0 0.0
        %722 = vmatprep.mubr.f32.mxu0 0.0
        %723 = vmatmul.mubr.f32.gmra.mrb[0].mxu0 %v656
        %v724 = vpop.f32.mrb[0].mxu0
        %v725 = vadd.f32 0.0, %v724
        %v726 = vpop.f32.mrb[0].mxu0
        %727 = vdwg.mxu0
        %728 = vmatprep.subr.mxu0 0.0
        %729 = vmatpush1.msra.mxu0 %v633
        %730 = vmatprep.subr.mxu0 0.0
        %731 = vmatpush1.msra.mxu0 %v634
        %732 = vmatprep.subr.mxu0 0.0
        %733 = vmatpush1.msra.mxu0 %v635
        %734 = vmatprep.subr.mxu0 0.0
        %735 = vmatpush1.msra.mxu0 %v636
        %736 = vmatprep.subr.mxu0 0.0
        %737 = vmatpush1.msra.mxu0 %v637
        %738 = vmatprep.subr.mxu0 0.0
        %739 = vmatpush1.msra.mxu0 %v638
        %740 = vmatprep.subr.mxu0 0.0
        %741 = vmatpush1.msra.mxu0 %v639
        %742 = vmatprep.subr.mxu0 0.0
        %743 = vmatpush1.msra.mxu0 %v640
        %744 = vmatprep.subr.mxu0 0.0
        %745 = vmatpush1.msra.mxu0 %v641
        %746 = vmatprep.subr.mxu0 0.0
        %747 = vmatpush1.msra.mxu0 %v642
        %748 = vmatprep.subr.mxu0 0.0
        %749 = vmatpush1.msra.mxu0 %v643
        %750 = vmatprep.subr.mxu0 0.0
        %751 = vmatpush1.msra.mxu0 %v644
        %752 = vmatprep.subr.mxu0 0.0
        %753 = vmatpush1.msra.mxu0 %v645
        %754 = vmatprep.subr.mxu0 0.0
        %755 = vmatpush1.msra.mxu0 %v646
        %756 = vmatprep.subr.mxu0 0.0
        %757 = vmatpush1.msra.mxu0 %v647
        %758 = vmatprep.subr.mxu0 0.0
        %759 = vmatpush1.msra.mxu0 %v648
        %760 = vmatprep.subr.mxu0 0.0
        %761 = vmatpush1.msra.mxu0 0.0
        %762 = vmatprep.subr.mxu0 0.0
        %763 = vmatpush1.msra.mxu0 0.0
        %764 = vmatprep.subr.mxu0 0.0
        %765 = vmatpush1.msra.mxu0 0.0
        %766 = vmatprep.subr.mxu0 0.0
        %767 = vmatpush1.msra.mxu0 0.0
        %768 = vmatprep.subr.mxu0 0.0
        %769 = vmatpush1.msra.mxu0 0.0
        %770 = vmatprep.subr.mxu0 0.0
        %771 = vmatpush1.msra.mxu0 0.0
        %772 = vmatprep.subr.mxu0 0.0
        %773 = vmatpush1.msra.mxu0 0.0
        %774 = vmatprep.subr.mxu0 0.0
        %775 = vmatpush1.msra.mxu0 0.0
        %776 = vmatprep.subr.mxu0 0.0
        %777 = vmatpush1.msra.mxu0 0.0
        %778 = vmatprep.subr.mxu0 0.0
        %779 = vmatpush1.msra.mxu0 0.0
        %780 = vmatprep.subr.mxu0 0.0
        %781 = vmatpush1.msra.mxu0 0.0
        %782 = vmatprep.subr.mxu0 0.0
        %783 = vmatpush1.msra.mxu0 0.0
        %784 = vmatprep.subr.mxu0 0.0
        %785 = vmatpush1.msra.mxu0 0.0
        %786 = vmatprep.subr.mxu0 0.0
        %787 = vmatpush1.msra.mxu0 0.0
        %788 = vmatprep.subr.mxu0 0.0
        %789 = vmatpush1.msra.mxu0 0.0
        %790 = vmatprep.subr.mxu0 0.0
        %791 = vmatpush1.msra.mxu0 0.0
        %792 = vmatprep.mubr.f32.mxu0 0.0
        %793 = vmatmul.mubr.f32.gmra.mrb[0].mxu0 %v310
        %v794 = vpop.f32.mrb[0].mxu0
        %v795 = vadd.f32 %v725, %v794
        %v796 = vpop.f32.mrb[0].mxu0
        %797 = vdwg.mxu0
        %v798 = vld [vmem:[#allocation10 + $0xa0] sm:$0xff]
        %v799 = vld [vmem:[#allocation10 + $0xa8] sm:$0xff]
        %v800 = vld [vmem:[#allocation10 + $0xb0] sm:$0xff]
        %v801 = vld [vmem:[#allocation10 + $0xb8] sm:$0xff]
        %v803 = vsel %vm325, %v631, 0
        %805 = vmatprep.subr.mxu0 0.0
        %806 = vmatpush1.msra.mxu0 %v798
        %807 = vmatprep.subr.mxu0 0.0
        %808 = vmatpush1.msra.mxu0 %v799
        %809 = vmatprep.subr.mxu0 0.0
        %810 = vmatpush1.msra.mxu0 %v800
        %811 = vmatprep.subr.mxu0 0.0
        %812 = vmatpush1.msra.mxu0 %v801
        %813 = vmatprep.subr.mxu0 0.0
        %814 = vmatpush1.msra.mxu0 0.0
        %815 = vmatprep.subr.mxu0 0.0
        %816 = vmatpush1.msra.mxu0 0.0
        %817 = vmatprep.subr.mxu0 0.0
        %818 = vmatpush1.msra.mxu0 0.0
        %819 = vmatprep.subr.mxu0 0.0
        %820 = vmatpush1.msra.mxu0 0.0
        %821 = vmatprep.subr.mxu0 0.0
        %822 = vmatpush1.msra.mxu0 0.0
        %823 = vmatprep.subr.mxu0 0.0
        %824 = vmatpush1.msra.mxu0 0.0
        %825 = vmatprep.subr.mxu0 0.0
        %826 = vmatpush1.msra.mxu0 0.0
        %827 = vmatprep.subr.mxu0 0.0
        %828 = vmatpush1.msra.mxu0 0.0
        %829 = vmatprep.subr.mxu0 0.0
        %830 = vmatpush1.msra.mxu0 0.0
        %831 = vmatprep.subr.mxu0 0.0
        %832 = vmatpush1.msra.mxu0 0.0
        %833 = vmatprep.subr.mxu0 0.0
        %834 = vmatpush1.msra.mxu0 0.0
        %835 = vmatprep.subr.mxu0 0.0
        %836 = vmatpush1.msra.mxu0 0.0
        %837 = vmatprep.subr.mxu0 0.0
        %838 = vmatpush1.msra.mxu0 0.0
        %839 = vmatprep.subr.mxu0 0.0
        %840 = vmatpush1.msra.mxu0 0.0
        %841 = vmatprep.subr.mxu0 0.0
        %842 = vmatpush1.msra.mxu0 0.0
        %843 = vmatprep.subr.mxu0 0.0
        %844 = vmatpush1.msra.mxu0 0.0
        %845 = vmatprep.subr.mxu0 0.0
        %846 = vmatpush1.msra.mxu0 0.0
        %847 = vmatprep.subr.mxu0 0.0
        %848 = vmatpush1.msra.mxu0 0.0
        %849 = vmatprep.subr.mxu0 0.0
        %850 = vmatpush1.msra.mxu0 0.0
        %851 = vmatprep.subr.mxu0 0.0
        %852 = vmatpush1.msra.mxu0 0.0
        %853 = vmatprep.subr.mxu0 0.0
        %854 = vmatpush1.msra.mxu0 0.0
        %855 = vmatprep.subr.mxu0 0.0
        %856 = vmatpush1.msra.mxu0 0.0
        %857 = vmatprep.subr.mxu0 0.0
        %858 = vmatpush1.msra.mxu0 0.0
        %859 = vmatprep.subr.mxu0 0.0
        %860 = vmatpush1.msra.mxu0 0.0
        %861 = vmatprep.subr.mxu0 0.0
        %862 = vmatpush1.msra.mxu0 0.0
        %863 = vmatprep.subr.mxu0 0.0
        %864 = vmatpush1.msra.mxu0 0.0
        %865 = vmatprep.subr.mxu0 0.0
        %866 = vmatpush1.msra.mxu0 0.0
        %867 = vmatprep.subr.mxu0 0.0
        %868 = vmatpush1.msra.mxu0 0.0
        %869 = vmatprep.mubr.f32.mxu0 0.0
        %870 = vmatmul.mubr.f32.gmra.mrb[0].mxu0 %v803
        %v871 = vpop.f32.mrb[0].mxu0
        %v872 = vadd.f32 0.0, %v871
        %v873 = vpop.f32.mrb[0].mxu0
        %874 = vdwg.mxu0
        %v875 = vadd.f32 %v795, %v872
        %v876 = vld [vmem:[#allocation10 + $0xc0] sm:$0x1]
        %v877 = vlaneseq
        %v878 = vshrl.u32 %v877, 7
        %v879 = vsub.s32 0, %v878
        %v880 = vrot.slane %v876, %v879
        %v881 = vadd.f32 %v875, %v880
        %v882 = vxor.u32 %v881, 2147483648
        %v883 = vmul.f32 %v882, 1.442695
        %v884 = vpow.pop %v883
        %v885 = vadd.f32 %v884, 1.0
        %v886 = vrcp.pop %v885
        %v887 = vmul.f32 1.0, %v886
        %v888 = vtanh.pop %v881
        %890 = vrot.lane.b32.xlu0 %v632, 32
        %v891 = vpop.permute.xlu0 %890
        %v893 = vmul.f32 %v887, %v891
        %895 = vrot.lane.b32.xlu0 %v888, 64
        %v896 = vpop.permute.xlu0 %895
        %v898 = vmul.f32 %v887, %v896
        %900 = vrot.lane.b32.xlu0 %v898, 32
        %v901 = vpop.permute.xlu0 %900
        %v903 = vadd.f32 %v893, %v901
        %v904 = vtanh.pop %v903
        %906 = vrot.lane.b32.xlu0 %v904, 64
        %v907 = vpop.permute.xlu0 %906
        %v909 = vmul.f32 %v887, %v907
        %911 = vrot.lane.b32.xlu0 %v909, 32
        %v912 = vpop.permute.xlu0 %911
        %vm914 = vcmask 254976
        %915 = vst.msk [vmem:[#allocation12] sm:$0x3] %vm914, %v912
        %917 = vrot.lane.b32.xlu0 %v903, 96
        %v918 = vpop.permute.xlu0 %917
        %920 = vst.msk [vmem:[#allocation14] sm:$0x3] %vm914, %v918
        %v921 = vld [vmem:[%s311] sm:$0x3]
        %s922 = scalar_lea.vmem [#allocation14], 2
        %v923 = vld [vmem:[%s922] sm:$0x3]
        %v924 = vld [vmem:[#allocation10 + $0xc8] sm:$0xff]
        %v925 = vld [vmem:[#allocation10 + $0xd0] sm:$0xff]
        %v926 = vld [vmem:[#allocation10 + $0xd8] sm:$0xff]
        %v927 = vld [vmem:[#allocation10 + $0xe0] sm:$0xff]
        %v928 = vld [vmem:[#allocation10 + $0xe8] sm:$0xff]
        %v929 = vld [vmem:[#allocation10 + $0xf0] sm:$0xff]
        %v930 = vld [vmem:[#allocation10 + $0xf8] sm:$0xff]
        %v931 = vld [vmem:[#allocation10 + $0x100] sm:$0xff]
        %v933 = vsel %vm325, %v921, 0
        %935 = vmatprep.subr.mxu0 0.0
        %936 = vmatpush1.msra.mxu0 %v928
        %937 = vmatprep.subr.mxu0 0.0
        %938 = vmatpush1.msra.mxu0 %v929
        %939 = vmatprep.subr.mxu0 0.0
        %940 = vmatpush1.msra.mxu0 %v930
        %941 = vmatprep.subr.mxu0 0.0
        %942 = vmatpush1.msra.mxu0 %v931
        %943 = vmatprep.subr.mxu0 0.0
        %944 = vmatpush1.msra.mxu0 0.0
        %945 = vmatprep.subr.mxu0 0.0
        %946 = vmatpush1.msra.mxu0 0.0
        %947 = vmatprep.subr.mxu0 0.0
        %948 = vmatpush1.msra.mxu0 0.0
        %949 = vmatprep.subr.mxu0 0.0
        %950 = vmatpush1.msra.mxu0 0.0
        %951 = vmatprep.subr.mxu0 0.0
        %952 = vmatpush1.msra.mxu0 0.0
        %953 = vmatprep.subr.mxu0 0.0
        %954 = vmatpush1.msra.mxu0 0.0
        %955 = vmatprep.subr.mxu0 0.0
        %956 = vmatpush1.msra.mxu0 0.0
        %957 = vmatprep.subr.mxu0 0.0
        %958 = vmatpush1.msra.mxu0 0.0
        %959 = vmatprep.subr.mxu0 0.0
        %960 = vmatpush1.msra.mxu0 0.0
        %961 = vmatprep.subr.mxu0 0.0
        %962 = vmatpush1.msra.mxu0 0.0
        %963 = vmatprep.subr.mxu0 0.0
        %964 = vmatpush1.msra.mxu0 0.0
        %965 = vmatprep.subr.mxu0 0.0
        %966 = vmatpush1.msra.mxu0 0.0
        %967 = vmatprep.subr.mxu0 0.0
        %968 = vmatpush1.msra.mxu0 0.0
        %969 = vmatprep.subr.mxu0 0.0
        %970 = vmatpush1.msra.mxu0 0.0
        %971 = vmatprep.subr.mxu0 0.0
        %972 = vmatpush1.msra.mxu0 0.0
        %973 = vmatprep.subr.mxu0 0.0
        %974 = vmatpush1.msra.mxu0 0.0
        %975 = vmatprep.subr.mxu0 0.0
        %976 = vmatpush1.msra.mxu0 0.0
        %977 = vmatprep.subr.mxu0 0.0
        %978 = vmatpush1.msra.mxu0 0.0
        %979 = vmatprep.subr.mxu0 0.0
        %980 = vmatpush1.msra.mxu0 0.0
        %981 = vmatprep.subr.mxu0 0.0
        %982 = vmatpush1.msra.mxu0 0.0
        %983 = vmatprep.subr.mxu0 0.0
        %984 = vmatpush1.msra.mxu0 0.0
        %985 = vmatprep.subr.mxu0 0.0
        %986 = vmatpush1.msra.mxu0 0.0
        %987 = vmatprep.subr.mxu0 0.0
        %988 = vmatpush1.msra.mxu0 0.0
        %989 = vmatprep.subr.mxu0 0.0
        %990 = vmatpush1.msra.mxu0 0.0
        %991 = vmatprep.subr.mxu0 0.0
        %992 = vmatpush1.msra.mxu0 0.0
        %993 = vmatprep.subr.mxu0 0.0
        %994 = vmatpush1.msra.mxu0 0.0
        %995 = vmatprep.subr.mxu0 0.0
        %996 = vmatpush1.msra.mxu0 0.0
        %997 = vmatprep.subr.mxu0 0.0
        %998 = vmatpush1.msra.mxu0 0.0
        %999 = vmatprep.mubr.f32.mxu0 0.0
        %1000 = vmatmul.mubr.f32.gmra.mrb[0].mxu0 %v933
        %v1001 = vpop.f32.mrb[0].mxu0
        %v1002 = vadd.f32 0.0, %v1001
        %v1003 = vpop.f32.mrb[0].mxu0
        %1004 = vdwg.mxu0
        %v1005 = vsel %vm325, %v912, 0
        %1007 = vmatprep.subr.mxu0 0.0
        %1008 = vmatpush1.msra.mxu0 %v924
        %1009 = vmatprep.subr.mxu0 0.0
        %1010 = vmatpush1.msra.mxu0 %v925
        %1011 = vmatprep.subr.mxu0 0.0
        %1012 = vmatpush1.msra.mxu0 %v926
        %1013 = vmatprep.subr.mxu0 0.0
        %1014 = vmatpush1.msra.mxu0 %v927
        %1015 = vmatprep.subr.mxu0 0.0
        %1016 = vmatpush1.msra.mxu0 0.0
        %1017 = vmatprep.subr.mxu0 0.0
        %1018 = vmatpush1.msra.mxu0 0.0
        %1019 = vmatprep.subr.mxu0 0.0
        %1020 = vmatpush1.msra.mxu0 0.0
        %1021 = vmatprep.subr.mxu0 0.0
        %1022 = vmatpush1.msra.mxu0 0.0
        %1023 = vmatprep.subr.mxu0 0.0
        %1024 = vmatpush1.msra.mxu0 0.0
        %1025 = vmatprep.subr.mxu0 0.0
        %1026 = vmatpush1.msra.mxu0 0.0
        %1027 = vmatprep.subr.mxu0 0.0
        %1028 = vmatpush1.msra.mxu0 0.0
        %1029 = vmatprep.subr.mxu0 0.0
        %1030 = vmatpush1.msra.mxu0 0.0
        %1031 = vmatprep.subr.mxu0 0.0
        %1032 = vmatpush1.msra.mxu0 0.0
        %1033 = vmatprep.subr.mxu0 0.0
        %1034 = vmatpush1.msra.mxu0 0.0
        %1035 = vmatprep.subr.mxu0 0.0
        %1036 = vmatpush1.msra.mxu0 0.0
        %1037 = vmatprep.subr.mxu0 0.0
        %1038 = vmatpush1.msra.mxu0 0.0
        %1039 = vmatprep.subr.mxu0 0.0
        %1040 = vmatpush1.msra.mxu0 0.0
        %1041 = vmatprep.subr.mxu0 0.0
        %1042 = vmatpush1.msra.mxu0 0.0
        %1043 = vmatprep.subr.mxu0 0.0
        %1044 = vmatpush1.msra.mxu0 0.0
        %1045 = vmatprep.subr.mxu0 0.0
        %1046 = vmatpush1.msra.mxu0 0.0
        %1047 = vmatprep.subr.mxu0 0.0
        %1048 = vmatpush1.msra.mxu0 0.0
        %1049 = vmatprep.subr.mxu0 0.0
        %1050 = vmatpush1.msra.mxu0 0.0
        %1051 = vmatprep.subr.mxu0 0.0
        %1052 = vmatpush1.msra.mxu0 0.0
        %1053 = vmatprep.subr.mxu0 0.0
        %1054 = vmatpush1.msra.mxu0 0.0
        %1055 = vmatprep.subr.mxu0 0.0
        %1056 = vmatpush1.msra.mxu0 0.0
        %1057 = vmatprep.subr.mxu0 0.0
        %1058 = vmatpush1.msra.mxu0 0.0
        %1059 = vmatprep.subr.mxu0 0.0
        %1060 = vmatpush1.msra.mxu0 0.0
        %1061 = vmatprep.subr.mxu0 0.0
        %1062 = vmatpush1.msra.mxu0 0.0
        %1063 = vmatprep.subr.mxu0 0.0
        %1064 = vmatpush1.msra.mxu0 0.0
        %1065 = vmatprep.subr.mxu0 0.0
        %1066 = vmatpush1.msra.mxu0 0.0
        %1067 = vmatprep.subr.mxu0 0.0
        %1068 = vmatpush1.msra.mxu0 0.0
        %1069 = vmatprep.subr.mxu0 0.0
        %1070 = vmatpush1.msra.mxu0 0.0
        %1071 = vmatprep.mubr.f32.mxu0 0.0
        %1072 = vmatmul.mubr.f32.gmra.mrb[0].mxu0 %v1005
        %v1073 = vpop.f32.mrb[0].mxu0
        %v1074 = vadd.f32 %v1002, %v1073
        %v1075 = vpop.f32.mrb[0].mxu0
        %1076 = vdwg.mxu0
        %v1077 = vld [vmem:[#allocation10 + $0x108] sm:$0x1]
        %v1078 = vlaneseq
        %v1079 = vshrl.u32 %v1078, 7
        %v1080 = vsub.s32 0, %v1079
        %v1081 = vrot.slane %v1077, %v1080
        %v1082 = vadd.f32 %v1074, %v1081
        %v1083 = vxor.u32 %v1082, 2147483648
        %v1084 = vmul.f32 %v1083, 1.442695
        %v1085 = vpow.pop %v1084
        %v1086 = vadd.f32 %v1085, 1.0
        %v1087 = vrcp.pop %v1086
        %v1088 = vmul.f32 1.0, %v1087
        %v1089 = vtanh.pop %v1082
        %1091 = vrot.lane.b32.xlu0 %v923, 32
        %v1092 = vpop.permute.xlu0 %1091
        %v1094 = vmul.f32 %v1088, %v1092
        %1096 = vrot.lane.b32.xlu0 %v1089, 64
        %v1097 = vpop.permute.xlu0 %1096
        %v1099 = vmul.f32 %v1088, %v1097
        %1101 = vrot.lane.b32.xlu0 %v1099, 32
        %v1102 = vpop.permute.xlu0 %1101
        %v1104 = vadd.f32 %v1094, %v1102
        %v1105 = vtanh.pop %v1104
        %1107 = vrot.lane.b32.xlu0 %v1105, 64
        %v1108 = vpop.permute.xlu0 %1107
        %v1110 = vmul.f32 %v1088, %v1108
        %1112 = vrot.lane.b32.xlu0 %v1110, 32
        %v1113 = vpop.permute.xlu0 %1112
        %1115 = vst.msk [vmem:[%s311] sm:$0x3] %vm914, %v1113
        %1117 = vrot.lane.b32.xlu0 %v1104, 96
        %v1118 = vpop.permute.xlu0 %1117
        %1120 = vst.msk [vmem:[%s922] sm:$0x3] %vm914, %v1118
        %v1121 = vld [vmem:[#allocation10 + $0x170] sm:$0xff]
        %v1122 = vld [vmem:[#allocation10 + $0x178] sm:$0xff]
        %v1123 = vld [vmem:[#allocation10 + $0x180] sm:$0xff]
        %v1124 = vld [vmem:[#allocation10 + $0x188] sm:$0xff]
        %v1125 = vld [vmem:[#allocation10 + $0x190] sm:$0xff]
        %v1126 = vld [vmem:[#allocation10 + $0x198] sm:$0xff]
        %v1127 = vld [vmem:[#allocation10 + $0x1a0] sm:$0xff]
        %v1128 = vld [vmem:[#allocation10 + $0x1a8] sm:$0xff]
        %1129 = vmatprep.subr.mxu0 0.0
        %1130 = vmatpush1.msra.mxu0 %v1125
        %1131 = vmatprep.subr.mxu0 0.0
        %1132 = vmatpush1.msra.mxu0 %v1126
        %1133 = vmatprep.subr.mxu0 0.0
        %1134 = vmatpush1.msra.mxu0 %v1127
        %1135 = vmatprep.subr.mxu0 0.0
        %1136 = vmatpush1.msra.mxu0 %v1128
        %1137 = vmatprep.subr.mxu0 0.0
        %1138 = vmatpush1.msra.mxu0 0.0
        %1139 = vmatprep.subr.mxu0 0.0
        %1140 = vmatpush1.msra.mxu0 0.0
        %1141 = vmatprep.subr.mxu0 0.0
        %1142 = vmatpush1.msra.mxu0 0.0
        %1143 = vmatprep.subr.mxu0 0.0
        %1144 = vmatpush1.msra.mxu0 0.0
        %1145 = vmatprep.subr.mxu0 0.0
        %1146 = vmatpush1.msra.mxu0 0.0
        %1147 = vmatprep.subr.mxu0 0.0
        %1148 = vmatpush1.msra.mxu0 0.0
        %1149 = vmatprep.subr.mxu0 0.0
        %1150 = vmatpush1.msra.mxu0 0.0
        %1151 = vmatprep.subr.mxu0 0.0
        %1152 = vmatpush1.msra.mxu0 0.0
        %1153 = vmatprep.subr.mxu0 0.0
        %1154 = vmatpush1.msra.mxu0 0.0
        %1155 = vmatprep.subr.mxu0 0.0
        %1156 = vmatpush1.msra.mxu0 0.0
        %1157 = vmatprep.subr.mxu0 0.0
        %1158 = vmatpush1.msra.mxu0 0.0
        %1159 = vmatprep.subr.mxu0 0.0
        %1160 = vmatpush1.msra.mxu0 0.0
        %1161 = vmatprep.subr.mxu0 0.0
        %1162 = vmatpush1.msra.mxu0 0.0
        %1163 = vmatprep.subr.mxu0 0.0
        %1164 = vmatpush1.msra.mxu0 0.0
        %1165 = vmatprep.subr.mxu0 0.0
        %1166 = vmatpush1.msra.mxu0 0.0
        %1167 = vmatprep.subr.mxu0 0.0
        %1168 = vmatpush1.msra.mxu0 0.0
        %1169 = vmatprep.subr.mxu0 0.0
        %1170 = vmatpush1.msra.mxu0 0.0
        %1171 = vmatprep.subr.mxu0 0.0
        %1172 = vmatpush1.msra.mxu0 0.0
        %1173 = vmatprep.subr.mxu0 0.0
        %1174 = vmatpush1.msra.mxu0 0.0
        %1175 = vmatprep.subr.mxu0 0.0
        %1176 = vmatpush1.msra.mxu0 0.0
        %1177 = vmatprep.subr.mxu0 0.0
        %1178 = vmatpush1.msra.mxu0 0.0
        %1179 = vmatprep.subr.mxu0 0.0
        %1180 = vmatpush1.msra.mxu0 0.0
        %1181 = vmatprep.subr.mxu0 0.0
        %1182 = vmatpush1.msra.mxu0 0.0
        %1183 = vmatprep.subr.mxu0 0.0
        %1184 = vmatpush1.msra.mxu0 0.0
        %1185 = vmatprep.subr.mxu0 0.0
        %1186 = vmatpush1.msra.mxu0 0.0
        %1187 = vmatprep.subr.mxu0 0.0
        %1188 = vmatpush1.msra.mxu0 0.0
        %1189 = vmatprep.subr.mxu0 0.0
        %1190 = vmatpush1.msra.mxu0 0.0
        %1191 = vmatprep.subr.mxu0 0.0
        %1192 = vmatpush1.msra.mxu0 0.0
        %1193 = vmatprep.mubr.f32.mxu0 0.0
        %1194 = vmatmul.mubr.f32.gmra.mrb[0].mxu0 %v656
        %v1195 = vpop.f32.mrb[0].mxu0
        %v1196 = vadd.f32 0.0, %v1195
        %v1197 = vpop.f32.mrb[0].mxu0
        %1198 = vdwg.mxu0
        %v1199 = vsel %vm325, %v1113, 0
        %1201 = vmatprep.subr.mxu0 0.0
        %1202 = vmatpush1.msra.mxu0 %v1121
        %1203 = vmatprep.subr.mxu0 0.0
        %1204 = vmatpush1.msra.mxu0 %v1122
        %1205 = vmatprep.subr.mxu0 0.0
        %1206 = vmatpush1.msra.mxu0 %v1123
        %1207 = vmatprep.subr.mxu0 0.0
        %1208 = vmatpush1.msra.mxu0 %v1124
        %1209 = vmatprep.subr.mxu0 0.0
        %1210 = vmatpush1.msra.mxu0 0.0
        %1211 = vmatprep.subr.mxu0 0.0
        %1212 = vmatpush1.msra.mxu0 0.0
        %1213 = vmatprep.subr.mxu0 0.0
        %1214 = vmatpush1.msra.mxu0 0.0
        %1215 = vmatprep.subr.mxu0 0.0
        %1216 = vmatpush1.msra.mxu0 0.0
        %1217 = vmatprep.subr.mxu0 0.0
        %1218 = vmatpush1.msra.mxu0 0.0
        %1219 = vmatprep.subr.mxu0 0.0
        %1220 = vmatpush1.msra.mxu0 0.0
        %1221 = vmatprep.subr.mxu0 0.0
        %1222 = vmatpush1.msra.mxu0 0.0
        %1223 = vmatprep.subr.mxu0 0.0
        %1224 = vmatpush1.msra.mxu0 0.0
        %1225 = vmatprep.subr.mxu0 0.0
        %1226 = vmatpush1.msra.mxu0 0.0
        %1227 = vmatprep.subr.mxu0 0.0
        %1228 = vmatpush1.msra.mxu0 0.0
        %1229 = vmatprep.subr.mxu0 0.0
        %1230 = vmatpush1.msra.mxu0 0.0
        %1231 = vmatprep.subr.mxu0 0.0
        %1232 = vmatpush1.msra.mxu0 0.0
        %1233 = vmatprep.subr.mxu0 0.0
        %1234 = vmatpush1.msra.mxu0 0.0
        %1235 = vmatprep.subr.mxu0 0.0
        %1236 = vmatpush1.msra.mxu0 0.0
        %1237 = vmatprep.subr.mxu0 0.0
        %1238 = vmatpush1.msra.mxu0 0.0
        %1239 = vmatprep.subr.mxu0 0.0
        %1240 = vmatpush1.msra.mxu0 0.0
        %1241 = vmatprep.subr.mxu0 0.0
        %1242 = vmatpush1.msra.mxu0 0.0
        %1243 = vmatprep.subr.mxu0 0.0
        %1244 = vmatpush1.msra.mxu0 0.0
        %1245 = vmatprep.subr.mxu0 0.0
        %1246 = vmatpush1.msra.mxu0 0.0
        %1247 = vmatprep.subr.mxu0 0.0
        %1248 = vmatpush1.msra.mxu0 0.0
        %1249 = vmatprep.subr.mxu0 0.0
        %1250 = vmatpush1.msra.mxu0 0.0
        %1251 = vmatprep.subr.mxu0 0.0
        %1252 = vmatpush1.msra.mxu0 0.0
        %1253 = vmatprep.subr.mxu0 0.0
        %1254 = vmatpush1.msra.mxu0 0.0
        %1255 = vmatprep.subr.mxu0 0.0
        %1256 = vmatpush1.msra.mxu0 0.0
        %1257 = vmatprep.subr.mxu0 0.0
        %1258 = vmatpush1.msra.mxu0 0.0
        %1259 = vmatprep.subr.mxu0 0.0
        %1260 = vmatpush1.msra.mxu0 0.0
        %1261 = vmatprep.subr.mxu0 0.0
        %1262 = vmatpush1.msra.mxu0 0.0
        %1263 = vmatprep.subr.mxu0 0.0
        %1264 = vmatpush1.msra.mxu0 0.0
        %1265 = vmatprep.mubr.f32.mxu0 0.0
        %1266 = vmatmul.mubr.f32.gmra.mrb[0].mxu0 %v1199
        %v1267 = vpop.f32.mrb[0].mxu0
        %v1268 = vadd.f32 %v1196, %v1267
        %v1269 = vpop.f32.mrb[0].mxu0
        %1270 = vdwg.mxu0
        %v1271 = vld [vmem:[#allocation10 + $0x1b0] sm:$0x1]
        %v1272 = vlaneseq
        %v1273 = vshrl.u32 %v1272, 7
        %v1274 = vsub.s32 0, %v1273
        %v1275 = vrot.slane %v1271, %v1274
        %v1276 = vadd.f32 %v1268, %v1275
        %1277 = vst [vmem:[%s272] sm:$0x3] %v1276
        %s1278 = sand.u32 %s123, 1
        %s1279 = scalar_lea.sflag [#allocation7], %s1278
        %s1280 = sand.u32 %s123, 1
        %s1281 = smul.addr %s1280, 2
        %s1282 = scalar_lea.vmem [#allocation11], %s1281
        // Predicated region
        $region53: #{decoder_pallas.1} parent=35 // pred_check
          %p1283 = pneg %p133
        $region54: #{decoder_pallas.1} parent=35 // pred_check_branch
          %1285 = sbr.rel (%p1283) target = $region56
        $region55: #{decoder_pallas.1} parent=35 // pred_region
          %s1287 = ssub.s32 32, 32
          %1288 = vsyncadd %s1279, %s1287
          %s1289 = smul.addr %s31, 32
          %s1290 = scalar_lea.hbm %s5, %s1289
          %s1292 = sshll.u32 %s1282, 4
          %s1293 = int_to_ptr.vmem [resolvable:$true] %s1292
          %1295 = dma.vmem_to_hbm [thread:$0]  %s1293, 32, %s1290, %s1279
        $region56: #{decoder_pallas.1} parent=35 // pred_fallthru
          _
        // Predicated region
        $region57: #{decoder_pallas.1} parent=35 // pred_check
          %p1296 = pneg %p154
        $region58: #{decoder_pallas.1} parent=35 // pred_check_branch
          %1298 = sbr.rel (%p1296) target = $region60
        $region59: #{decoder_pallas.1} parent=35 // pred_region
          %s1300 = ssub.s32 64, 64
          %1301 = vsyncadd [#allocation13], %s1300
          %s1302 = sshll.u32 [#allocation12], 4
          %s1303 = int_to_ptr.vmem [resolvable:$true] %s1302
          %1308 = dma.vmem_to_hbm [thread:$0]  %s1303, 64, %s6, [#allocation13], 32, 32, 2
        $region60: #{decoder_pallas.1} parent=35 // pred_fallthru
          _
        // Predicated region
        $region61: #{decoder_pallas.1} parent=35 // pred_check
          %p1309 = pneg %p175
        $region62: #{decoder_pallas.1} parent=35 // pred_check_branch
          %1311 = sbr.rel (%p1309) target = $region64
        $region63: #{decoder_pallas.1} parent=35 // pred_region
          %s1313 = ssub.s32 64, 64
          %1314 = vsyncadd [#allocation13], %s1313
          %s1315 = sshll.u32 [#allocation14], 4
          %s1316 = int_to_ptr.vmem [resolvable:$true] %s1315
          %1321 = dma.vmem_to_hbm [thread:$0]  %s1316, 64, %s7, [#allocation13], 32, 32, 2
        $region64: #{decoder_pallas.1} parent=35 // pred_fallthru
          _
        // Predicated region
        $region65: #{decoder_pallas.1} parent=35 // pred_check
          %p1322 = pneg %p154
        $region66: #{decoder_pallas.1} parent=35 // pred_check_branch
          %1324 = sbr.rel (%p1322) target = $region68
        $region67: #{decoder_pallas.1} parent=35 // pred_region
          %1325 = dma.done [#allocation13], 64
        $region68: #{decoder_pallas.1} parent=35 // pred_fallthru
          _
        // Predicated region
        $region69: #{decoder_pallas.1} parent=35 // pred_check
          %p1326 = pneg %p175
        $region70: #{decoder_pallas.1} parent=35 // pred_check_branch
          %1328 = sbr.rel (%p1326) target = $region72
        $region71: #{decoder_pallas.1} parent=35 // pred_region
          %1329 = dma.done [#allocation13], 64
        $region72: #{decoder_pallas.1} parent=35 // pred_fallthru
          _
      $region36: #{decoder_pallas.1} parent=5 // pred_fallthru
        _
      %p1330 = scmp.le.s32.totalorder 2, %s26
      // Predicated region
      $region73: #{decoder_pallas.1} parent=5 // pred_check
        %p1331 = pneg %p1330
      $region74: #{decoder_pallas.1} parent=5 // pred_check_branch
        %1333 = sbr.rel (%p1331) target = $region76
      $region75: #{decoder_pallas.1} parent=5 // pred_region
        %s1334 = ssub.s32 %s26, 2
        // Predicated region
        $region77: #{decoder_pallas.1} parent=75 // pred_check
          %p1335 = pneg %p139
        $region78: #{decoder_pallas.1} parent=75 // pred_check_branch
          %1337 = sbr.rel (%p1335) target = $region80
        $region79: #{decoder_pallas.1} parent=75 // pred_region
          %s1338 = sand.u32 %s124, 1
          %s1339 = scalar_lea.sflag [#allocation7], %s1338
          %s1340 = sand.u32 %s124, 1
          %s1341 = smul.addr %s1340, 2
          %s1342 = scalar_lea.vmem [#allocation11], %s1341
          %1343 = dma.done %s1339, 32
        $region80: #{decoder_pallas.1} parent=75 // pred_fallthru
          _
      $region76: #{decoder_pallas.1} parent=5 // pred_fallthru
        _
    $region6: #{decoder_pallas.1} parent=1 // loop_footer
      %s30 = sadd.s32 1, %s26
    $region7: #{decoder_pallas.1} parent=1 // loop_footer_branch
      %25 = sbr.rel target = $region3
    $region8: #{decoder_pallas.1} parent=1 // loop_exit
      _
    %1344 = vsyncpa [#allocation6], 1
    %s1345 = scalar_lea.sflag [#allocation6], 1
    %1346 = vsyncpa %s1345, 1
    %1347 = vsyncpa [#allocation9], 1
    %1348 = vsyncpa [#allocation7], 1
    %s1349 = scalar_lea.sflag [#allocation7], 1
    %1350 = vsyncpa %s1349, 1
    %1351 = vsyncpa [#allocation13], 1

</llo_original>
